<compile_context>
chip_gen: v5e
topology: v5e:2x2
jax: 0.10.0
libtpu: 0.0.40
codegen_flags: <defaults>
</compile_context>

<pallas_src>
import functools

import jax
import jax.numpy as jnp
from jax import lax
from jax.experimental import pallas as pl
from jax.experimental.pallas import tpu as pltpu


def _round_up(x, m):
    return (x + m - 1) // m * m


_VMEM_SPEC = pl.BlockSpec(memory_space=pltpu.MemorySpace.VMEM)


# ---------------------------------------------------------------------------
# Fused decoder-step kernel
# ---------------------------------------------------------------------------

def _decoder_kernel(*refs, num_layers, hidden_pad):
    """Fused decode step: one-hot embedding -> L LSTM cells -> fc.

    Positional refs (all whole-array VMEM):
      ids      : (Bp, 1)  int32 token ids
      emb      : (Vp, Ep) bf16 embedding table (zero padded)
      h_in     : (L, Bp, Hp) f32 previous hidden states
      c_in     : (L, Bp, Hp) f32 previous cell states
      wih[l]   : (Ep|Hp, 4*Hp) bf16, gate slabs i,f,g,o each 128-aligned
      whh[l]   : (Hp, 4*Hp)    bf16
      b[l]     : (1, 4*Hp)     f32  (b_ih + b_hh)
      fc_w     : (Hp, Vp) bf16
      fc_b     : (1, Vp)  f32
    outputs: pred (Bp, Vp) f32, h_out / c_out (L, Bp, Hp) f32 (aliased in place)
    """
    nl = num_layers
    Hp = hidden_pad

    ids_ref, emb_ref, h_in_ref, c_in_ref = refs[0:4]
    wih_refs = refs[4:4 + nl]
    whh_refs = refs[4 + nl:4 + 2 * nl]
    b_refs = refs[4 + 2 * nl:4 + 3 * nl]
    fcw_ref, fcb_ref = refs[4 + 3 * nl:4 + 3 * nl + 2]
    pred_ref, h_out_ref, c_out_ref = refs[4 + 3 * nl + 2:]

    Bp = ids_ref.shape[0]
    Vp = emb_ref.shape[0]

    # Embedding lookup as a one-hot matmul (keeps the gather inside the kernel
    # and on the MXU; Vp is lane-dense so no masked lanes).
    iota_v = lax.broadcasted_iota(jnp.int32, (Bp, Vp), 1)
    one_hot = jnp.where(ids_ref[...] == iota_v,
                        jnp.float32(1.0), jnp.float32(0.0)).astype(jnp.bfloat16)
    x = jnp.dot(one_hot, emb_ref[...], preferred_element_type=jnp.float32)
    # nn.Dropout: identity in eval mode.
    # TODO(synk): training-mode dropout (embedding + LSTM inter-layer) not
    # implemented; forward matches model.eval() behaviour.

    for layer in range(nl):
        h_prev = h_in_ref[layer]                       # (Bp, Hp) f32
        c_prev = c_in_ref[layer]
        gates = (jnp.dot(x.astype(jnp.bfloat16), wih_refs[layer][...],
                         preferred_element_type=jnp.float32)
                 + jnp.dot(h_prev.astype(jnp.bfloat16), whh_refs[layer][...],
                           preferred_element_type=jnp.float32)
                 + b_refs[layer][...])
        # PyTorch gate order i, f, g, o; each slab starts on a 128-lane boundary.
        i = jax.nn.sigmoid(gates[:, 0 * Hp:1 * Hp])
        f = jax.nn.sigmoid(gates[:, 1 * Hp:2 * Hp])
        g = jnp.tanh(gates[:, 2 * Hp:3 * Hp])
        o = jax.nn.sigmoid(gates[:, 3 * Hp:4 * Hp])
        c_new = f * c_prev + i * g
        h_new = o * jnp.tanh(c_new)
        h_out_ref[layer] = h_new
        c_out_ref[layer] = c_new
        x = h_new                                      # inter-layer dropout = id

    pred_ref[...] = (jnp.dot(x.astype(jnp.bfloat16), fcw_ref[...],
                             preferred_element_type=jnp.float32)
                     + fcb_ref[...])


# ---------------------------------------------------------------------------
# Parameters (padded bf16 kernel weights + unpadded f32 reference copies)
# ---------------------------------------------------------------------------

def init_decoder_params(key, input_size, embedding_size, hidden_size, num_layers):
    V, E, H, L = input_size, embedding_size, hidden_size, num_layers
    Vp, Ep, Hp = _round_up(V, 128), _round_up(E, 128), _round_up(H, 128)

    keys = jax.random.split(key, 3 + 4 * L)
    emb = jax.random.normal(keys[0], (V, E), jnp.float32) * 0.1
    fc_w = jax.random.normal(keys[1], (V, H), jnp.float32) * 0.1   # (out, in)
    fc_b = jax.random.normal(keys[2], (V,), jnp.float32) * 0.1

    ref = {"embedding": emb, "fc_w": fc_w, "fc_b": fc_b,
           "wih": [], "whh": [], "b_ih": [], "b_hh": []}

    emb_p = jnp.zeros((Vp, Ep), jnp.bfloat16).at[:V, :E].set(emb.astype(jnp.bfloat16))
    fcw_p = jnp.zeros((Hp, Vp), jnp.bfloat16).at[:H, :V].set(fc_w.T.astype(jnp.bfloat16))
    fcb_p = jnp.zeros((1, Vp), jnp.float32).at[0, :V].set(fc_b)

    wih_list, whh_list, b_list = [], [], []
    for l in range(L):
        in_dim = E if l == 0 else H
        in_pad = Ep if l == 0 else Hp
        k0, k1, k2, k3 = keys[3 + 4 * l: 7 + 4 * l]
        w_ih = jax.random.normal(k0, (4 * H, in_dim), jnp.float32) * 0.1
        w_hh = jax.random.normal(k1, (4 * H, H), jnp.float32) * 0.1
        b_ih = jax.random.normal(k2, (4 * H,), jnp.float32) * 0.1
        b_hh = jax.random.normal(k3, (4 * H,), jnp.float32) * 0.1
        ref["wih"].append(w_ih)
        ref["whh"].append(w_hh)
        ref["b_ih"].append(b_ih)
        ref["b_hh"].append(b_hh)

        wih_p = jnp.zeros((in_pad, 4 * Hp), jnp.bfloat16)
        whh_p = jnp.zeros((Hp, 4 * Hp), jnp.bfloat16)
        b_p = jnp.zeros((1, 4 * Hp), jnp.float32)
        for g in range(4):  # place each gate slab at a 128-aligned offset
            wih_p = wih_p.at[:in_dim, g * Hp:g * Hp + H].set(
                w_ih[g * H:(g + 1) * H, :].T.astype(jnp.bfloat16))
            whh_p = whh_p.at[:H, g * Hp:g * Hp + H].set(
                w_hh[g * H:(g + 1) * H, :].T.astype(jnp.bfloat16))
            b_p = b_p.at[0, g * Hp:g * Hp + H].set(
                b_ih[g * H:(g + 1) * H] + b_hh[g * H:(g + 1) * H])
        wih_list.append(wih_p)
        whh_list.append(whh_p)
        b_list.append(b_p)

    return {
        "emb": emb_p, "fc_w": fcw_p, "fc_b": fcb_p,
        "wih": wih_list, "whh": whh_list, "b": b_list,
        "dims": {"vocab": V, "embed": E, "hidden": H, "layers": L,
                 "vocab_pad": Vp, "embed_pad": Ep, "hidden_pad": Hp},
        "ref": ref,
    }


# ---------------------------------------------------------------------------
# Forward (pads to TPU-friendly shapes, one fused pallas_call, unpads)
# ---------------------------------------------------------------------------

def decoder_forward(params, x, hidden, cell):
    d = params["dims"]
    V, E, H, L = d["vocab"], d["embed"], d["hidden"], d["layers"]
    Vp, Ep, Hp = d["vocab_pad"], d["embed_pad"], d["hidden_pad"]
    B = x.shape[0]
    Bp = max(_round_up(B, 8), 8)

    ids = jnp.zeros((Bp, 1), jnp.int32).at[:B, 0].set(x.astype(jnp.int32))
    h_p = jnp.zeros((L, Bp, Hp), jnp.float32).at[:, :B, :H].set(hidden)
    c_p = jnp.zeros((L, Bp, Hp), jnp.float32).at[:, :B, :H].set(cell)

    inputs = [ids, params["emb"], h_p, c_p]
    inputs += [params["wih"][l] for l in range(L)]
    inputs += [params["whh"][l] for l in range(L)]
    inputs += [params["b"][l] for l in range(L)]
    inputs += [params["fc_w"], params["fc_b"]]

    # Advisory cost estimate for the XLA scheduler.
    flops = 2 * Bp * Vp * Ep                          # one-hot embedding matmul
    for l in range(L):
        in_p = Ep if l == 0 else Hp
        flops += 2 * Bp * (in_p + Hp) * (4 * Hp)      # gate matmuls
    flops += 2 * Bp * Hp * Vp                         # fc
    transcendentals = 5 * Bp * Hp * L                 # 3 sigmoid + 2 tanh per elem
    bytes_accessed = sum(int(a.size) * a.dtype.itemsize for a in inputs)
    bytes_accessed += (Bp * Vp + 2 * L * Bp * Hp) * 4  # outputs

    kernel = functools.partial(_decoder_kernel, num_layers=L, hidden_pad=Hp)

    # TODO(synk): for large H / real vocab sizes, tile the 4H and V lane axes
    # with a grid (and mark the V axis "parallel" for v7x's 2 TensorCores)
    # instead of whole-array VMEM residency.
    pred_p, h_new_p, c_new_p = pl.pallas_call(
        kernel,
        out_shape=(jax.ShapeDtypeStruct((Bp, Vp), jnp.float32),
                   jax.ShapeDtypeStruct((L, Bp, Hp), jnp.float32),
                   jax.ShapeDtypeStruct((L, Bp, Hp), jnp.float32)),
        in_specs=[_VMEM_SPEC] * len(inputs),
        out_specs=(_VMEM_SPEC, _VMEM_SPEC, _VMEM_SPEC),
        input_output_aliases={2: 1, 3: 2},            # hidden/cell updated in place
        compiler_params=pltpu.CompilerParams(vmem_limit_bytes=64 * 1024 * 1024),
        cost_estimate=pl.CostEstimate(flops=int(flops),
                                      transcendentals=int(transcendentals),
                                      bytes_accessed=int(bytes_accessed)),
    )(*inputs)

    pred = pred_p[:B, :V]
    new_hidden = h_new_p[:, :B, :H]
    new_cell = c_new_p[:, :B, :H]
    return pred, (new_hidden, new_cell)


# ---------------------------------------------------------------------------
# Pure-JAX reference (unpadded f32) for correctness check
# ---------------------------------------------------------------------------

def reference_forward(ref, x, hidden, cell, num_layers, hidden_size):
    H = hidden_size
    layer_in = ref["embedding"][x]
    new_h, new_c = [], []
    for l in range(num_layers):
        gates = (layer_in @ ref["wih"][l].T + hidden[l] @ ref["whh"][l].T
                 + ref["b_ih"][l] + ref["b_hh"][l])
        i = jax.nn.sigmoid(gates[:, 0 * H:1 * H])
        f = jax.nn.sigmoid(gates[:, 1 * H:2 * H])
        g = jnp.tanh(gates[:, 2 * H:3 * H])
        o = jax.nn.sigmoid(gates[:, 3 * H:4 * H])
        c_new = f * cell[l] + i * g
        h_new = o * jnp.tanh(c_new)
        new_h.append(h_new)
        new_c.append(c_new)
        layer_in = h_new
    pred = layer_in @ ref["fc_w"].T + ref["fc_b"]
    return pred, (jnp.stack(new_h), jnp.stack(new_c))


# ---------------------------------------------------------------------------
# Demo
# ---------------------------------------------------------------------------

if __name__ == "__main__":
    input_size = 16        # vocab
    embedding_size = 32
    hidden_size = 32
    num_layers = 2
    batch = 4

    key = jax.random.PRNGKey(0)
    k_params, k_x, k_h, k_c = jax.random.split(key, 4)

    params = init_decoder_params(
        k_params, input_size, embedding_size, hidden_size, num_layers)

    x = jax.random.randint(k_x, (batch,), 0, input_size, dtype=jnp.int32)
    hidden = jax.random.normal(k_h, (num_layers, batch, hidden_size), jnp.float32)
    cell = jax.random.normal(k_c, (num_layers, batch, hidden_size), jnp.float32)

    pred, (new_hidden, new_cell) = decoder_forward(params, x, hidden, cell)
    jax.block_until_ready((pred, new_hidden, new_cell))

    assert pred.shape == (batch, input_size)
    assert new_hidden.shape == (num_layers, batch, hidden_size)
    assert new_cell.shape == (num_layers, batch, hidden_size)

    # Correctness vs unpadded f32 reference (bf16 matmul operands -> loose tol).
    pred_r, (nh_r, nc_r) = reference_forward(
        params["ref"], x, hidden, cell, num_layers, hidden_size)
    assert jnp.allclose(pred, pred_r, atol=3e-2, rtol=3e-2)
    assert jnp.allclose(new_hidden, nh_r, atol=3e-2, rtol=3e-2)
    assert jnp.allclose(new_cell, nc_r, atol=3e-2, rtol=3e-2)

    print("KERNEL_OK")
</pallas_src>

<mosaic_0001>
module attributes {stable_mosaic.version = 11 : i64} {
  func.func @_decoder_kernel(%arg0: memref<8x1xi32, #tpu.memory_space<vmem>>, %arg1: memref<128x128xbf16, #tpu.memory_space<vmem>>, %arg2: memref<2x8x128xf32, #tpu.memory_space<vmem>>, %arg3: memref<2x8x128xf32, #tpu.memory_space<vmem>>, %arg4: memref<128x512xbf16, #tpu.memory_space<vmem>>, %arg5: memref<128x512xbf16, #tpu.memory_space<vmem>>, %arg6: memref<128x512xbf16, #tpu.memory_space<vmem>>, %arg7: memref<128x512xbf16, #tpu.memory_space<vmem>>, %arg8: memref<1x512xf32, #tpu.memory_space<vmem>>, %arg9: memref<1x512xf32, #tpu.memory_space<vmem>>, %arg10: memref<128x128xbf16, #tpu.memory_space<vmem>>, %arg11: memref<1x128xf32, #tpu.memory_space<vmem>>, %arg12: memref<8x128xf32, #tpu.memory_space<vmem>>, %arg13: memref<2x8x128xf32, #tpu.memory_space<vmem>>, %arg14: memref<2x8x128xf32, #tpu.memory_space<vmem>>) attributes {dimension_semantics = [], scalar_prefetch = 0 : i64, scratch_operands = 0 : i64, tpu.core_type = #tpu.core_type<tc>} {
    %0 = tpu.iota {dimensions = array<i32: 1>} : vector<8x128xi32>
    %c0 = arith.constant 0 : index
    %c0_0 = arith.constant 0 : index
    %1 = vector.load %arg0[%c0, %c0_0] : memref<8x1xi32, #tpu.memory_space<vmem>>, vector<8x1xi32>
    %2 = vector.broadcast %1 : vector<8x1xi32> to vector<8x128xi32>
    %3 = arith.cmpi eq, %2, %0 : vector<8x128xi32>
    %cst = arith.constant 1.000000e+00 : f32
    %cst_1 = arith.constant 0.000000e+00 : f32
    %4 = vector.broadcast %cst : f32 to vector<8x128xf32>
    %5 = vector.broadcast %cst_1 : f32 to vector<8x128xf32>
    %6 = arith.select %3, %4, %5 : vector<8x128xi1>, vector<8x128xf32>
    %7 = arith.truncf %6 : vector<8x128xf32> to vector<8x128xbf16>
    %c0_2 = arith.constant 0 : index
    %c0_3 = arith.constant 0 : index
    %8 = vector.load %arg1[%c0_2, %c0_3] : memref<128x128xbf16, #tpu.memory_space<vmem>>, vector<128x128xbf16>
    %cst_4 = arith.constant dense<0.000000e+00> : vector<8x128xf32>
    %9 = tpu.matmul %7, %8, %cst_4 {dimension_numbers = #tpu.dot_dimension_numbers<[1], [0], [0], [1], [0, 0, 1, 1], [], []>} : vector<8x128xbf16>, vector<128x128xbf16>, vector<8x128xf32> -> vector<8x128xf32>
    %c0_5 = arith.constant 0 : index
    %c0_6 = arith.constant 0 : index
    %c0_7 = arith.constant 0 : index
    %10 = vector.load %arg2[%c0_5, %c0_6, %c0_7] : memref<2x8x128xf32, #tpu.memory_space<vmem>>, vector<1x8x128xf32>
    %11 = vector.shape_cast %10 : vector<1x8x128xf32> to vector<8x128xf32>
    %c0_8 = arith.constant 0 : index
    %c0_9 = arith.constant 0 : index
    %c0_10 = arith.constant 0 : index
    %12 = vector.load %arg3[%c0_8, %c0_9, %c0_10] : memref<2x8x128xf32, #tpu.memory_space<vmem>>, vector<1x8x128xf32>
    %13 = vector.shape_cast %12 : vector<1x8x128xf32> to vector<8x128xf32>
    %14 = arith.truncf %9 : vector<8x128xf32> to vector<8x128xbf16>
    %c0_11 = arith.constant 0 : index
    %c0_12 = arith.constant 0 : index
    %15 = vector.load %arg4[%c0_11, %c0_12] : memref<128x512xbf16, #tpu.memory_space<vmem>>, vector<128x512xbf16>
    %cst_13 = arith.constant dense<0.000000e+00> : vector<8x512xf32>
    %16 = tpu.matmul %14, %15, %cst_13 {dimension_numbers = #tpu.dot_dimension_numbers<[1], [0], [0], [1], [0, 0, 1, 1], [], []>} : vector<8x128xbf16>, vector<128x512xbf16>, vector<8x512xf32> -> vector<8x512xf32>
    %17 = arith.truncf %11 : vector<8x128xf32> to vector<8x128xbf16>
    %c0_14 = arith.constant 0 : index
    %c0_15 = arith.constant 0 : index
    %18 = vector.load %arg6[%c0_14, %c0_15] : memref<128x512xbf16, #tpu.memory_space<vmem>>, vector<128x512xbf16>
    %cst_16 = arith.constant dense<0.000000e+00> : vector<8x512xf32>
    %19 = tpu.matmul %17, %18, %cst_16 {dimension_numbers = #tpu.dot_dimension_numbers<[1], [0], [0], [1], [0, 0, 1, 1], [], []>} : vector<8x128xbf16>, vector<128x512xbf16>, vector<8x512xf32> -> vector<8x512xf32>
    %20 = arith.addf %16, %19 : vector<8x512xf32>
    %c0_17 = arith.constant 0 : index
    %c0_18 = arith.constant 0 : index
    %21 = vector.load %arg8[%c0_17, %c0_18] : memref<1x512xf32, #tpu.memory_space<vmem>>, vector<1x512xf32>
    %22 = vector.broadcast %21 : vector<1x512xf32> to vector<8x512xf32>
    %23 = arith.addf %20, %22 : vector<8x512xf32>
    %24 = vector.extract_strided_slice %23 {offsets = [0, 0], sizes = [8, 128], strides = [1, 1]} : vector<8x512xf32> to vector<8x128xf32>
    %25 = arith.negf %24 : vector<8x128xf32>
    %26 = math.exp %25 : vector<8x128xf32>
    %cst_19 = arith.constant 1.000000e+00 : f32
    %27 = vector.broadcast %cst_19 : f32 to vector<8x128xf32>
    %28 = arith.addf %27, %26 : vector<8x128xf32>
    %29 = arith.divf %27, %28 : vector<8x128xf32>
    %30 = vector.extract_strided_slice %23 {offsets = [0, 128], sizes = [8, 128], strides = [1, 1]} : vector<8x512xf32> to vector<8x128xf32>
    %31 = arith.negf %30 : vector<8x128xf32>
    %32 = math.exp %31 : vector<8x128xf32>
    %cst_20 = arith.constant 1.000000e+00 : f32
    %33 = vector.broadcast %cst_20 : f32 to vector<8x128xf32>
    %34 = arith.addf %33, %32 : vector<8x128xf32>
    %35 = arith.divf %33, %34 : vector<8x128xf32>
    %36 = vector.extract_strided_slice %23 {offsets = [0, 256], sizes = [8, 128], strides = [1, 1]} : vector<8x512xf32> to vector<8x128xf32>
    %37 = math.tanh %36 : vector<8x128xf32>
    %38 = vector.extract_strided_slice %23 {offsets = [0, 384], sizes = [8, 128], strides = [1, 1]} : vector<8x512xf32> to vector<8x128xf32>
    %39 = arith.negf %38 : vector<8x128xf32>
    %40 = math.exp %39 : vector<8x128xf32>
    %cst_21 = arith.constant 1.000000e+00 : f32
    %41 = vector.broadcast %cst_21 : f32 to vector<8x128xf32>
    %42 = arith.addf %41, %40 : vector<8x128xf32>
    %43 = arith.divf %41, %42 : vector<8x128xf32>
    %44 = arith.mulf %35, %13 : vector<8x128xf32>
    %45 = arith.mulf %29, %37 : vector<8x128xf32>
    %46 = arith.addf %44, %45 : vector<8x128xf32>
    %47 = math.tanh %46 : vector<8x128xf32>
    %48 = arith.mulf %43, %47 : vector<8x128xf32>
    %c0_22 = arith.constant 0 : index
    %c0_23 = arith.constant 0 : index
    %c0_24 = arith.constant 0 : index
    %49 = vector.load %arg13[%c0_22, %c0_23, %c0_24] : memref<2x8x128xf32, #tpu.memory_space<vmem>>, vector<1x8x128xf32>
    %50 = vector.shape_cast %49 : vector<1x8x128xf32> to vector<8x128xf32>
    %51 = vector.shape_cast %48 : vector<8x128xf32> to vector<1x8x128xf32>
    tpu.vector_store %arg13[%c0_22, %c0_23, %c0_24], %51 {strides = array<i32>} : memref<2x8x128xf32, #tpu.memory_space<vmem>>, vector<1x8x128xf32>,
    %c0_25 = arith.constant 0 : index
    %c0_26 = arith.constant 0 : index
    %c0_27 = arith.constant 0 : index
    %52 = vector.load %arg14[%c0_25, %c0_26, %c0_27] : memref<2x8x128xf32, #tpu.memory_space<vmem>>, vector<1x8x128xf32>
    %53 = vector.shape_cast %52 : vector<1x8x128xf32> to vector<8x128xf32>
    %54 = vector.shape_cast %46 : vector<8x128xf32> to vector<1x8x128xf32>
    tpu.vector_store %arg14[%c0_25, %c0_26, %c0_27], %54 {strides = array<i32>} : memref<2x8x128xf32, #tpu.memory_space<vmem>>, vector<1x8x128xf32>,
    %c1 = arith.constant 1 : index
    %c0_28 = arith.constant 0 : index
    %c0_29 = arith.constant 0 : index
    %55 = vector.load %arg2[%c1, %c0_28, %c0_29] : memref<2x8x128xf32, #tpu.memory_space<vmem>>, vector<1x8x128xf32>
    %56 = vector.shape_cast %55 : vector<1x8x128xf32> to vector<8x128xf32>
    %c1_30 = arith.constant 1 : index
    %c0_31 = arith.constant 0 : index
    %c0_32 = arith.constant 0 : index
    %57 = vector.load %arg3[%c1_30, %c0_31, %c0_32] : memref<2x8x128xf32, #tpu.memory_space<vmem>>, vector<1x8x128xf32>
    %58 = vector.shape_cast %57 : vector<1x8x128xf32> to vector<8x128xf32>
    %59 = arith.truncf %48 : vector<8x128xf32> to vector<8x128xbf16>
    %c0_33 = arith.constant 0 : index
    %c0_34 = arith.constant 0 : index
    %60 = vector.load %arg5[%c0_33, %c0_34] : memref<128x512xbf16, #tpu.memory_space<vmem>>, vector<128x512xbf16>
    %cst_35 = arith.constant dense<0.000000e+00> : vector<8x512xf32>
    %61 = tpu.matmul %59, %60, %cst_35 {dimension_numbers = #tpu.dot_dimension_numbers<[1], [0], [0], [1], [0, 0, 1, 1], [], []>} : vector<8x128xbf16>, vector<128x512xbf16>, vector<8x512xf32> -> vector<8x512xf32>
    %62 = arith.truncf %56 : vector<8x128xf32> to vector<8x128xbf16>
    %c0_36 = arith.constant 0 : index
    %c0_37 = arith.constant 0 : index
    %63 = vector.load %arg7[%c0_36, %c0_37] : memref<128x512xbf16, #tpu.memory_space<vmem>>, vector<128x512xbf16>
    %cst_38 = arith.constant dense<0.000000e+00> : vector<8x512xf32>
    %64 = tpu.matmul %62, %63, %cst_38 {dimension_numbers = #tpu.dot_dimension_numbers<[1], [0], [0], [1], [0, 0, 1, 1], [], []>} : vector<8x128xbf16>, vector<128x512xbf16>, vector<8x512xf32> -> vector<8x512xf32>
    %65 = arith.addf %61, %64 : vector<8x512xf32>
    %c0_39 = arith.constant 0 : index
    %c0_40 = arith.constant 0 : index
    %66 = vector.load %arg9[%c0_39, %c0_40] : memref<1x512xf32, #tpu.memory_space<vmem>>, vector<1x512xf32>
    %67 = vector.broadcast %66 : vector<1x512xf32> to vector<8x512xf32>
    %68 = arith.addf %65, %67 : vector<8x512xf32>
    %69 = vector.extract_strided_slice %68 {offsets = [0, 0], sizes = [8, 128], strides = [1, 1]} : vector<8x512xf32> to vector<8x128xf32>
    %70 = arith.negf %69 : vector<8x128xf32>
    %71 = math.exp %70 : vector<8x128xf32>
    %cst_41 = arith.constant 1.000000e+00 : f32
    %72 = vector.broadcast %cst_41 : f32 to vector<8x128xf32>
    %73 = arith.addf %72, %71 : vector<8x128xf32>
    %74 = arith.divf %72, %73 : vector<8x128xf32>
    %75 = vector.extract_strided_slice %68 {offsets = [0, 128], sizes = [8, 128], strides = [1, 1]} : vector<8x512xf32> to vector<8x128xf32>
    %76 = arith.negf %75 : vector<8x128xf32>
    %77 = math.exp %76 : vector<8x128xf32>
    %cst_42 = arith.constant 1.000000e+00 : f32
    %78 = vector.broadcast %cst_42 : f32 to vector<8x128xf32>
    %79 = arith.addf %78, %77 : vector<8x128xf32>
    %80 = arith.divf %78, %79 : vector<8x128xf32>
    %81 = vector.extract_strided_slice %68 {offsets = [0, 256], sizes = [8, 128], strides = [1, 1]} : vector<8x512xf32> to vector<8x128xf32>
    %82 = math.tanh %81 : vector<8x128xf32>
    %83 = vector.extract_strided_slice %68 {offsets = [0, 384], sizes = [8, 128], strides = [1, 1]} : vector<8x512xf32> to vector<8x128xf32>
    %84 = arith.negf %83 : vector<8x128xf32>
    %85 = math.exp %84 : vector<8x128xf32>
    %cst_43 = arith.constant 1.000000e+00 : f32
    %86 = vector.broadcast %cst_43 : f32 to vector<8x128xf32>
    %87 = arith.addf %86, %85 : vector<8x128xf32>
    %88 = arith.divf %86, %87 : vector<8x128xf32>
    %89 = arith.mulf %80, %58 : vector<8x128xf32>
    %90 = arith.mulf %74, %82 : vector<8x128xf32>
    %91 = arith.addf %89, %90 : vector<8x128xf32>
    %92 = math.tanh %91 : vector<8x128xf32>
    %93 = arith.mulf %88, %92 : vector<8x128xf32>
    %c1_44 = arith.constant 1 : index
    %c0_45 = arith.constant 0 : index
    %c0_46 = arith.constant 0 : index
    %94 = vector.load %arg13[%c1_44, %c0_45, %c0_46] : memref<2x8x128xf32, #tpu.memory_space<vmem>>, vector<1x8x128xf32>
    %95 = vector.shape_cast %94 : vector<1x8x128xf32> to vector<8x128xf32>
    %96 = vector.shape_cast %93 : vector<8x128xf32> to vector<1x8x128xf32>
    tpu.vector_store %arg13[%c1_44, %c0_45, %c0_46], %96 {strides = array<i32>} : memref<2x8x128xf32, #tpu.memory_space<vmem>>, vector<1x8x128xf32>,
    %c1_47 = arith.constant 1 : index
    %c0_48 = arith.constant 0 : index
    %c0_49 = arith.constant 0 : index
    %97 = vector.load %arg14[%c1_47, %c0_48, %c0_49] : memref<2x8x128xf32, #tpu.memory_space<vmem>>, vector<1x8x128xf32>
    %98 = vector.shape_cast %97 : vector<1x8x128xf32> to vector<8x128xf32>
    %99 = vector.shape_cast %91 : vector<8x128xf32> to vector<1x8x128xf32>
    tpu.vector_store %arg14[%c1_47, %c0_48, %c0_49], %99 {strides = array<i32>} : memref<2x8x128xf32, #tpu.memory_space<vmem>>, vector<1x8x128xf32>,
    %100 = arith.truncf %93 : vector<8x128xf32> to vector<8x128xbf16>
    %c0_50 = arith.constant 0 : index
    %c0_51 = arith.constant 0 : index
    %101 = vector.load %arg10[%c0_50, %c0_51] : memref<128x128xbf16, #tpu.memory_space<vmem>>, vector<128x128xbf16>
    %cst_52 = arith.constant dense<0.000000e+00> : vector<8x128xf32>
    %102 = tpu.matmul %100, %101, %cst_52 {dimension_numbers = #tpu.dot_dimension_numbers<[1], [0], [0], [1], [0, 0, 1, 1], [], []>} : vector<8x128xbf16>, vector<128x128xbf16>, vector<8x128xf32> -> vector<8x128xf32>
    %c0_53 = arith.constant 0 : index
    %c0_54 = arith.constant 0 : index
    %103 = vector.load %arg11[%c0_53, %c0_54] : memref<1x128xf32, #tpu.memory_space<vmem>>, vector<1x128xf32>
    %104 = vector.broadcast %103 : vector<1x128xf32> to vector<8x128xf32>
    %105 = arith.addf %102, %104 : vector<8x128xf32>
    %c0_55 = arith.constant 0 : index
    %c0_56 = arith.constant 0 : index
    %106 = vector.load %arg12[%c0_55, %c0_56] : memref<8x128xf32, #tpu.memory_space<vmem>>, vector<8x128xf32>
    tpu.vector_store %arg12[%c0_55, %c0_56], %105 {strides = array<i32>} : memref<8x128xf32, #tpu.memory_space<vmem>>, vector<8x128xf32>,
    return
  }
}

</mosaic_0001>

<llo_original>
// kernel: tpu_custom_call.1
$region0: #{tpu_custom_call.1}
  #allocation0 [shape = 'u32[]', space=smem, size = 0x4, offset = 0x4, fixed_abs, tag = 'smem constant byte address 0x4 - core index']
  #allocation1 [shape = 'u32[72,128]{1,0:T(1,128)}', space=vmem, size = 0x9000, scoped, tag = 'internal scratch']
  %s0 = inlined_call_operand.vmem [shape: s32[8,1], index: 0, kind: input, shape index: {}]
  %s1 = inlined_call_operand.vmem [shape: bf16[128,128], index: 1, kind: input, shape index: {}]
  %s2 = inlined_call_operand.hbm [shape: f32[2,8,128], index: 2, kind: input, shape index: {}, may-alias: {2,13}]
  %s3 = inlined_call_operand.hbm [shape: f32[2,8,128], index: 3, kind: input, shape index: {}, may-alias: {3,14}]
  %s4 = inlined_call_operand.hbm [shape: bf16[128,512], index: 4, kind: input, shape index: {}]
  %s5 = inlined_call_operand.hbm [shape: bf16[128,512], index: 5, kind: input, shape index: {}]
  %s6 = inlined_call_operand.hbm [shape: bf16[128,512], index: 6, kind: input, shape index: {}]
  %s7 = inlined_call_operand.hbm [shape: bf16[128,512], index: 7, kind: input, shape index: {}]
  %s8 = inlined_call_operand.vmem [shape: f32[1,512], index: 8, kind: input, shape index: {}]
  %s9 = inlined_call_operand.vmem [shape: f32[1,512], index: 9, kind: input, shape index: {}]
  %s10 = inlined_call_operand.hbm [shape: bf16[128,128], index: 10, kind: input, shape index: {}]
  %s11 = inlined_call_operand.vmem [shape: f32[1,128], index: 11, kind: input, shape index: {}]
  %s12 = inlined_call_operand.hbm [shape: f32[8,128], index: 12, kind: output, shape index: {0}]
  %s13 = inlined_call_operand.hbm [shape: f32[2,8,128], index: 13, kind: output, shape index: {1}, may-alias: {2,13}]
  %s14 = inlined_call_operand.hbm [shape: f32[2,8,128], index: 14, kind: output, shape index: {2}, may-alias: {3,14}]
  %15 = xla_tuple %s12, %s13, %s14
  %s16 = sld [smem:[#allocation0]]
  $region102: #{tpu_custom_call.1} parent=0
    _
  %s18 = ssub.s32 1, %s16
  %s19 = scalar_select 0, %s18, %s16
  $region1: #{tpu_custom_call.1} parent=0
    #allocation2 [shape = 'u8[8192]{0}', space=vmem, size = 0x2000, scoped, tag = 'input window, operand 2, single buffered']
    #allocation3 [shape = 's32[1]{0}', space=sflag, size = 0x4, scoped, tag = 'scoped memory for tpu_custom_call.1']
    #allocation4 [shape = 's32[1]{0}', space=sflag, size = 0x4, scoped, tag = 'scoped memory for tpu_custom_call.1']
    #allocation5 [shape = 'u8[8192]{0}', space=vmem, size = 0x2000, scoped, tag = 'input window, operand 3, single buffered']
    #allocation6 [shape = 's32[1]{0}', space=sflag, size = 0x4, scoped, tag = 'scoped memory for tpu_custom_call.1']
    #allocation7 [shape = 'u8[131072]{0}', space=vmem, size = 0x20000, scoped, tag = 'input window, operand 4, single buffered']
    #allocation8 [shape = 'u8[131072]{0}', space=vmem, size = 0x20000, scoped, tag = 'input window, operand 5, single buffered']
    #allocation9 [shape = 's32[1]{0}', space=sflag, size = 0x4, scoped, tag = 'scoped memory for tpu_custom_call.1']
    #allocation10 [shape = 'u8[131072]{0}', space=vmem, size = 0x20000, scoped, tag = 'input window, operand 6, single buffered']
    #allocation11 [shape = 'u8[131072]{0}', space=vmem, size = 0x20000, scoped, tag = 'input window, operand 7, single buffered']
    #allocation12 [shape = 's32[1]{0}', space=sflag, size = 0x4, scoped, tag = 'scoped memory for tpu_custom_call.1']
    #allocation13 [shape = 'u8[32768]{0}', space=vmem, size = 0x8000, scoped, tag = 'input window, operand 10, single buffered']
    #allocation14 [shape = 'u8[4096]{0}', space=vmem, size = 0x1000, scoped, tag = 'output window, operand 0, single buffered']
    #allocation15 [shape = 'u8[8192]{0}', space=vmem, size = 0x2000, scoped, tag = 'output window, operand 1, single buffered']
    #allocation16 [shape = 's32[1]{0}', space=sflag, size = 0x4, scoped, tag = 'scoped memory for tpu_custom_call.1']
    #allocation17 [shape = 'u8[8192]{0}', space=vmem, size = 0x2000, scoped, tag = 'output window, operand 2, single buffered']
    %20 = vsyncpa [#allocation3], 0
    %21 = vsyncpa [#allocation6], 0
    %22 = vsyncpa [#allocation9], 0
    %23 = vsyncpa [#allocation12], 0
    %24 = vsyncpa [#allocation4], 0
    %25 = vsyncpa [#allocation16], 0
    // Predicated region
    $region2: #{tpu_custom_call.1} parent=1 // pred_check
      _
    $region3: #{tpu_custom_call.1} parent=1 // pred_check_branch
      %27 = sbr.rel (0) target = $region5
    $region4: #{tpu_custom_call.1} parent=1 // pred_region
      _
    $region5: #{tpu_custom_call.1} parent=1 // pred_fallthru
      _
    // Predicated region
    $region6: #{tpu_custom_call.1} parent=1 // pred_check
      _
    $region7: #{tpu_custom_call.1} parent=1 // pred_check_branch
      %29 = sbr.rel (0) target = $region9
    $region8: #{tpu_custom_call.1} parent=1 // pred_region
      _
    $region9: #{tpu_custom_call.1} parent=1 // pred_fallthru
      _
    // Predicated region
    $region10: #{tpu_custom_call.1} parent=1 // pred_check
      _
    $region11: #{tpu_custom_call.1} parent=1 // pred_check_branch
      %31 = sbr.rel (0) target = $region13
    $region12: #{tpu_custom_call.1} parent=1 // pred_region
      %33 = vsyncadd [#allocation3], 0
      %s34 = sshll.u32 %s2, 4
      %s35 = int_to_ptr.hbm [resolvable:$true] %s34
      %s36 = sshll.u32 [#allocation2], 4
      %s37 = int_to_ptr.vmem [resolvable:$true] %s36
      %42 = dma.hbm_to_vmem [thread:$0]  %s35, 256, %s37, [#allocation3], 128, 128, 8
    $region13: #{tpu_custom_call.1} parent=1 // pred_fallthru
      _
    // Predicated region
    $region14: #{tpu_custom_call.1} parent=1 // pred_check
      _
    $region15: #{tpu_custom_call.1} parent=1 // pred_check_branch
      %44 = sbr.rel (0) target = $region17
    $region16: #{tpu_custom_call.1} parent=1 // pred_region
      %46 = vsyncadd [#allocation6], 0
      %s47 = sshll.u32 %s3, 4
      %s48 = int_to_ptr.hbm [resolvable:$true] %s47
      %s49 = sshll.u32 [#allocation5], 4
      %s50 = int_to_ptr.vmem [resolvable:$true] %s49
      %55 = dma.hbm_to_vmem [thread:$0]  %s48, 256, %s50, [#allocation6], 128, 128, 8
    $region17: #{tpu_custom_call.1} parent=1 // pred_fallthru
      _
    // Predicated region
    $region18: #{tpu_custom_call.1} parent=1 // pred_check
      _
    $region19: #{tpu_custom_call.1} parent=1 // pred_check_branch
      %57 = sbr.rel (0) target = $region21
    $region20: #{tpu_custom_call.1} parent=1 // pred_region
      %59 = vsyncadd [#allocation6], 0
      %s60 = sshll.u32 %s4, 4
      %s61 = int_to_ptr.hbm [resolvable:$true] %s60
      %s62 = sshll.u32 [#allocation7], 4
      %s63 = int_to_ptr.vmem [resolvable:$true] %s62
      %68 = dma.hbm_to_vmem [thread:$0]  %s61, 4096, %s63, [#allocation6], 256, 256, 16
    $region21: #{tpu_custom_call.1} parent=1 // pred_fallthru
      _
    // Predicated region
    $region22: #{tpu_custom_call.1} parent=1 // pred_check
      _
    $region23: #{tpu_custom_call.1} parent=1 // pred_check_branch
      %70 = sbr.rel (0) target = $region25
    $region24: #{tpu_custom_call.1} parent=1 // pred_region
      %72 = vsyncadd [#allocation9], 0
      %s73 = sshll.u32 %s5, 4
      %s74 = int_to_ptr.hbm [resolvable:$true] %s73
      %s75 = sshll.u32 [#allocation8], 4
      %s76 = int_to_ptr.vmem [resolvable:$true] %s75
      %81 = dma.hbm_to_vmem [thread:$0]  %s74, 4096, %s76, [#allocation9], 256, 256, 16
    $region25: #{tpu_custom_call.1} parent=1 // pred_fallthru
      _
    // Predicated region
    $region26: #{tpu_custom_call.1} parent=1 // pred_check
      _
    $region27: #{tpu_custom_call.1} parent=1 // pred_check_branch
      %83 = sbr.rel (0) target = $region29
    $region28: #{tpu_custom_call.1} parent=1 // pred_region
      %85 = vsyncadd [#allocation9], 0
      %s86 = sshll.u32 %s6, 4
      %s87 = int_to_ptr.hbm [resolvable:$true] %s86
      %s88 = sshll.u32 [#allocation10], 4
      %s89 = int_to_ptr.vmem [resolvable:$true] %s88
      %94 = dma.hbm_to_vmem [thread:$0]  %s87, 4096, %s89, [#allocation9], 256, 256, 16
    $region29: #{tpu_custom_call.1} parent=1 // pred_fallthru
      _
    // Predicated region
    $region30: #{tpu_custom_call.1} parent=1 // pred_check
      _
    $region31: #{tpu_custom_call.1} parent=1 // pred_check_branch
      %96 = sbr.rel (0) target = $region33
    $region32: #{tpu_custom_call.1} parent=1 // pred_region
      %98 = vsyncadd [#allocation12], 0
      %s99 = sshll.u32 %s7, 4
      %s100 = int_to_ptr.hbm [resolvable:$true] %s99
      %s101 = sshll.u32 [#allocation11], 4
      %s102 = int_to_ptr.vmem [resolvable:$true] %s101
      %107 = dma.hbm_to_vmem [thread:$0]  %s100, 4096, %s102, [#allocation12], 256, 256, 16
    $region33: #{tpu_custom_call.1} parent=1 // pred_fallthru
      _
    // Predicated region
    $region34: #{tpu_custom_call.1} parent=1 // pred_check
      _
    $region35: #{tpu_custom_call.1} parent=1 // pred_check_branch
      %109 = sbr.rel (0) target = $region37
    $region36: #{tpu_custom_call.1} parent=1 // pred_region
      _
    $region37: #{tpu_custom_call.1} parent=1 // pred_fallthru
      _
    // Predicated region
    $region38: #{tpu_custom_call.1} parent=1 // pred_check
      _
    $region39: #{tpu_custom_call.1} parent=1 // pred_check_branch
      %111 = sbr.rel (0) target = $region41
    $region40: #{tpu_custom_call.1} parent=1 // pred_region
      _
    $region41: #{tpu_custom_call.1} parent=1 // pred_fallthru
      _
    // Predicated region
    $region42: #{tpu_custom_call.1} parent=1 // pred_check
      _
    $region43: #{tpu_custom_call.1} parent=1 // pred_check_branch
      %113 = sbr.rel (0) target = $region45
    $region44: #{tpu_custom_call.1} parent=1 // pred_region
      %115 = vsyncadd [#allocation12], 0
      %s116 = sshll.u32 %s10, 4
      %s117 = int_to_ptr.hbm [resolvable:$true] %s116
      %s118 = sshll.u32 [#allocation13], 4
      %s119 = int_to_ptr.vmem [resolvable:$true] %s118
      %124 = dma.hbm_to_vmem [thread:$0]  %s117, 1024, %s119, [#allocation12], 64, 64, 4
    $region45: #{tpu_custom_call.1} parent=1 // pred_fallthru
      _
    // Predicated region
    $region46: #{tpu_custom_call.1} parent=1 // pred_check
      _
    $region47: #{tpu_custom_call.1} parent=1 // pred_check_branch
      %126 = sbr.rel (0) target = $region49
    $region48: #{tpu_custom_call.1} parent=1 // pred_region
      _
    $region49: #{tpu_custom_call.1} parent=1 // pred_fallthru
      _
    // Predicated region
    $region50: #{tpu_custom_call.1} parent=1 // pred_check
      _
    $region51: #{tpu_custom_call.1} parent=1 // pred_check_branch
      %128 = sbr.rel (0) target = $region53
    $region52: #{tpu_custom_call.1} parent=1 // pred_region
      %130 = dma.done [#allocation3], 256
    $region53: #{tpu_custom_call.1} parent=1 // pred_fallthru
      _
    // Predicated region
    $region54: #{tpu_custom_call.1} parent=1 // pred_check
      _
    $region55: #{tpu_custom_call.1} parent=1 // pred_check_branch
      %132 = sbr.rel (0) target = $region57
    $region56: #{tpu_custom_call.1} parent=1 // pred_region
      %134 = dma.done [#allocation6], 256
    $region57: #{tpu_custom_call.1} parent=1 // pred_fallthru
      _
    // Predicated region
    $region58: #{tpu_custom_call.1} parent=1 // pred_check
      _
    $region59: #{tpu_custom_call.1} parent=1 // pred_check_branch
      %136 = sbr.rel (0) target = $region61
    $region60: #{tpu_custom_call.1} parent=1 // pred_region
      %138 = dma.done [#allocation6], 4096
    $region61: #{tpu_custom_call.1} parent=1 // pred_fallthru
      _
    // Predicated region
    $region62: #{tpu_custom_call.1} parent=1 // pred_check
      _
    $region63: #{tpu_custom_call.1} parent=1 // pred_check_branch
      %140 = sbr.rel (0) target = $region65
    $region64: #{tpu_custom_call.1} parent=1 // pred_region
      %142 = dma.done [#allocation9], 4096
    $region65: #{tpu_custom_call.1} parent=1 // pred_fallthru
      _
    // Predicated region
    $region66: #{tpu_custom_call.1} parent=1 // pred_check
      _
    $region67: #{tpu_custom_call.1} parent=1 // pred_check_branch
      %144 = sbr.rel (0) target = $region69
    $region68: #{tpu_custom_call.1} parent=1 // pred_region
      %146 = dma.done [#allocation9], 4096
    $region69: #{tpu_custom_call.1} parent=1 // pred_fallthru
      _
    // Predicated region
    $region70: #{tpu_custom_call.1} parent=1 // pred_check
      _
    $region71: #{tpu_custom_call.1} parent=1 // pred_check_branch
      %148 = sbr.rel (0) target = $region73
    $region72: #{tpu_custom_call.1} parent=1 // pred_region
      %150 = dma.done [#allocation12], 4096
    $region73: #{tpu_custom_call.1} parent=1 // pred_fallthru
      _
    // Predicated region
    $region74: #{tpu_custom_call.1} parent=1 // pred_check
      _
    $region75: #{tpu_custom_call.1} parent=1 // pred_check_branch
      %152 = sbr.rel (0) target = $region77
    $region76: #{tpu_custom_call.1} parent=1 // pred_region
      %154 = dma.done [#allocation12], 1024
    $region77: #{tpu_custom_call.1} parent=1 // pred_fallthru
      _
    %v155 = vlaneseq
    %v156 = vand.u32 %v155, 127
    %v157 = vld [vmem:[%s0] sm:$0xff]
    %158 = vset.pattern.permute.xlu0 0
    %159 = vperm.xlu0 %158, %v157
    %v160 = vpop.permute.xlu0 %159
    %vm161 = vcmp.eq.s32.totalorder %v160, %v156
    %v162 = vsel %vm161, 1.0, 0.0
    %v163 = vpack.c.bf16 %v162, %v162
    %v164 = vld [vmem:[%s1] sm:$0xf]
    %v165 = vld [vmem:[%s1 + $0x4] sm:$0xf]
    %v166 = vld [vmem:[%s1 + $0x8] sm:$0xf]
    %v167 = vld [vmem:[%s1 + $0xc] sm:$0xf]
    %v168 = vld [vmem:[%s1 + $0x10] sm:$0xf]
    %v169 = vld [vmem:[%s1 + $0x14] sm:$0xf]
    %v170 = vld [vmem:[%s1 + $0x18] sm:$0xf]
    %v171 = vld [vmem:[%s1 + $0x1c] sm:$0xf]
    %v172 = vld [vmem:[%s1 + $0x20] sm:$0xf]
    %v173 = vld [vmem:[%s1 + $0x24] sm:$0xf]
    %v174 = vld [vmem:[%s1 + $0x28] sm:$0xf]
    %v175 = vld [vmem:[%s1 + $0x2c] sm:$0xf]
    %v176 = vld [vmem:[%s1 + $0x30] sm:$0xf]
    %v177 = vld [vmem:[%s1 + $0x34] sm:$0xf]
    %v178 = vld [vmem:[%s1 + $0x38] sm:$0xf]
    %v179 = vld [vmem:[%s1 + $0x3c] sm:$0xf]
    %v196 = vunpack.c.l.b16 %v164
    %v197 = vunpack.c.l.b16 %v165
    %v198 = vunpack.c.l.b16 %v166
    %v199 = vunpack.c.l.b16 %v167
    %v200 = vunpack.c.l.b16 %v168
    %v201 = vunpack.c.l.b16 %v169
    %v202 = vunpack.c.l.b16 %v170
    %v203 = vunpack.c.l.b16 %v171
    %v204 = vunpack.c.l.b16 %v172
    %v205 = vunpack.c.l.b16 %v173
    %v206 = vunpack.c.l.b16 %v174
    %v207 = vunpack.c.l.b16 %v175
    %v208 = vunpack.c.l.b16 %v176
    %v209 = vunpack.c.l.b16 %v177
    %v210 = vunpack.c.l.b16 %v178
    %v211 = vunpack.c.l.b16 %v179
    %v212 = vpack.c.b16 %v197, %v196
    %v213 = vpack.c.b16 %v199, %v198
    %v214 = vpack.c.b16 %v201, %v200
    %v215 = vpack.c.b16 %v203, %v202
    %v216 = vpack.c.b16 %v205, %v204
    %v217 = vpack.c.b16 %v207, %v206
    %v218 = vpack.c.b16 %v209, %v208
    %v219 = vpack.c.b16 %v211, %v210
    %228 = vmatpush.bf16.msra.mxu0 %v219
    %229 = vmatpush.bf16.msra.mxu0 %v218
    %230 = vmatpush.bf16.msra.mxu0 %v217
    %231 = vmatpush.bf16.msra.mxu0 %v216
    %232 = vmatpush.bf16.msra.mxu0 %v215
    %233 = vmatpush.bf16.msra.mxu0 %v214
    %234 = vmatpush.bf16.msra.mxu0 %v213
    %235 = vmatpush.bf16.msra.mxu0 %v212
    %236 = vmatmul.bf16.gmra.mxu0 %v163
    %v237 = vpop.f32.mrf.mxu0
    %v238 = vadd.f32 0.0, %v237
    %v239 = vpop.f32.mrf.mxu0
    %240 = vdwg.mxu0
    %v241 = vld [vmem:[#allocation2] sm:$0xff]
    %v242 = vld [vmem:[#allocation5] sm:$0xff]
    %v243 = vpack.c.bf16 %v238, %v238
    %v244 = vld [vmem:[#allocation7] sm:$0xff]
    %v245 = vld [vmem:[#allocation7 + $0x8] sm:$0xff]
    %v246 = vld [vmem:[#allocation7 + $0x10] sm:$0xff]
    %v247 = vld [vmem:[#allocation7 + $0x18] sm:$0xff]
    %v248 = vld [vmem:[#allocation7 + $0x20] sm:$0xff]
    %v249 = vld [vmem:[#allocation7 + $0x28] sm:$0xff]
    %v250 = vld [vmem:[#allocation7 + $0x30] sm:$0xff]
    %v251 = vld [vmem:[#allocation7 + $0x38] sm:$0xff]
    %v252 = vld [vmem:[#allocation7 + $0x40] sm:$0xff]
    %v253 = vld [vmem:[#allocation7 + $0x48] sm:$0xff]
    %v254 = vld [vmem:[#allocation7 + $0x50] sm:$0xff]
    %v255 = vld [vmem:[#allocation7 + $0x58] sm:$0xff]
    %v256 = vld [vmem:[#allocation7 + $0x60] sm:$0xff]
    %v257 = vld [vmem:[#allocation7 + $0x68] sm:$0xff]
    %v258 = vld [vmem:[#allocation7 + $0x70] sm:$0xff]
    %v259 = vld [vmem:[#allocation7 + $0x78] sm:$0xff]
    %v260 = vld [vmem:[#allocation7 + $0x80] sm:$0xff]
    %v261 = vld [vmem:[#allocation7 + $0x88] sm:$0xff]
    %v262 = vld [vmem:[#allocation7 + $0x90] sm:$0xff]
    %v263 = vld [vmem:[#allocation7 + $0x98] sm:$0xff]
    %v264 = vld [vmem:[#allocation7 + $0xa0] sm:$0xff]
    %v265 = vld [vmem:[#allocation7 + $0xa8] sm:$0xff]
    %v266 = vld [vmem:[#allocation7 + $0xb0] sm:$0xff]
    %v267 = vld [vmem:[#allocation7 + $0xb8] sm:$0xff]
    %v268 = vld [vmem:[#allocation7 + $0xc0] sm:$0xff]
    %v269 = vld [vmem:[#allocation7 + $0xc8] sm:$0xff]
    %v270 = vld [vmem:[#allocation7 + $0xd0] sm:$0xff]
    %v271 = vld [vmem:[#allocation7 + $0xd8] sm:$0xff]
    %v272 = vld [vmem:[#allocation7 + $0xe0] sm:$0xff]
    %v273 = vld [vmem:[#allocation7 + $0xe8] sm:$0xff]
    %v274 = vld [vmem:[#allocation7 + $0xf0] sm:$0xff]
    %v275 = vld [vmem:[#allocation7 + $0xf8] sm:$0xff]
    %v276 = vpack.c.bf16 %v241, %v241
    %v277 = vld [vmem:[#allocation10] sm:$0xff]
    %v278 = vld [vmem:[#allocation10 + $0x8] sm:$0xff]
    %v279 = vld [vmem:[#allocation10 + $0x10] sm:$0xff]
    %v280 = vld [vmem:[#allocation10 + $0x18] sm:$0xff]
    %v281 = vld [vmem:[#allocation10 + $0x20] sm:$0xff]
    %v282 = vld [vmem:[#allocation10 + $0x28] sm:$0xff]
    %v283 = vld [vmem:[#allocation10 + $0x30] sm:$0xff]
    %v284 = vld [vmem:[#allocation10 + $0x38] sm:$0xff]
    %v285 = vld [vmem:[#allocation10 + $0x40] sm:$0xff]
    %v286 = vld [vmem:[#allocation10 + $0x48] sm:$0xff]
    %v287 = vld [vmem:[#allocation10 + $0x50] sm:$0xff]
    %v288 = vld [vmem:[#allocation10 + $0x58] sm:$0xff]
    %v289 = vld [vmem:[#allocation10 + $0x60] sm:$0xff]
    %v290 = vld [vmem:[#allocation10 + $0x68] sm:$0xff]
    %v291 = vld [vmem:[#allocation10 + $0x70] sm:$0xff]
    %v292 = vld [vmem:[#allocation10 + $0x78] sm:$0xff]
    %v293 = vld [vmem:[#allocation10 + $0x80] sm:$0xff]
    %v294 = vld [vmem:[#allocation10 + $0x88] sm:$0xff]
    %v295 = vld [vmem:[#allocation10 + $0x90] sm:$0xff]
    %v296 = vld [vmem:[#allocation10 + $0x98] sm:$0xff]
    %v297 = vld [vmem:[#allocation10 + $0xa0] sm:$0xff]
    %v298 = vld [vmem:[#allocation10 + $0xa8] sm:$0xff]
    %v299 = vld [vmem:[#allocation10 + $0xb0] sm:$0xff]
    %v300 = vld [vmem:[#allocation10 + $0xb8] sm:$0xff]
    %v301 = vld [vmem:[#allocation10 + $0xc0] sm:$0xff]
    %v302 = vld [vmem:[#allocation10 + $0xc8] sm:$0xff]
    %v303 = vld [vmem:[#allocation10 + $0xd0] sm:$0xff]
    %v304 = vld [vmem:[#allocation10 + $0xd8] sm:$0xff]
    %v305 = vld [vmem:[#allocation10 + $0xe0] sm:$0xff]
    %v306 = vld [vmem:[#allocation10 + $0xe8] sm:$0xff]
    %v307 = vld [vmem:[#allocation10 + $0xf0] sm:$0xff]
    %v308 = vld [vmem:[#allocation10 + $0xf8] sm:$0xff]
    %v341 = vunpack.c.l.b16 %v277
    %v342 = vunpack.c.h.b16 %v277
    %v343 = vunpack.c.l.b16 %v278
    %v344 = vunpack.c.h.b16 %v278
    %v345 = vunpack.c.l.b16 %v279
    %v346 = vunpack.c.h.b16 %v279
    %v347 = vunpack.c.l.b16 %v280
    %v348 = vunpack.c.h.b16 %v280
    %v349 = vunpack.c.l.b16 %v281
    %v350 = vunpack.c.h.b16 %v281
    %v351 = vunpack.c.l.b16 %v282
    %v352 = vunpack.c.h.b16 %v282
    %v353 = vunpack.c.l.b16 %v283
    %v354 = vunpack.c.h.b16 %v283
    %v355 = vunpack.c.l.b16 %v284
    %v356 = vunpack.c.h.b16 %v284
    %v357 = vunpack.c.l.b16 %v285
    %v358 = vunpack.c.h.b16 %v285
    %v359 = vunpack.c.l.b16 %v286
    %v360 = vunpack.c.h.b16 %v286
    %v361 = vunpack.c.l.b16 %v287
    %v362 = vunpack.c.h.b16 %v287
    %v363 = vunpack.c.l.b16 %v288
    %v364 = vunpack.c.h.b16 %v288
    %v365 = vunpack.c.l.b16 %v289
    %v366 = vunpack.c.h.b16 %v289
    %v367 = vunpack.c.l.b16 %v290
    %v368 = vunpack.c.h.b16 %v290
    %v369 = vunpack.c.l.b16 %v291
    %v370 = vunpack.c.h.b16 %v291
    %v371 = vunpack.c.l.b16 %v292
    %v372 = vunpack.c.h.b16 %v292
    %v373 = vunpack.c.l.b16 %v293
    %v374 = vunpack.c.h.b16 %v293
    %v375 = vunpack.c.l.b16 %v294
    %v376 = vunpack.c.h.b16 %v294
    %v377 = vunpack.c.l.b16 %v295
    %v378 = vunpack.c.h.b16 %v295
    %v379 = vunpack.c.l.b16 %v296
    %v380 = vunpack.c.h.b16 %v296
    %v381 = vunpack.c.l.b16 %v297
    %v382 = vunpack.c.h.b16 %v297
    %v383 = vunpack.c.l.b16 %v298
    %v384 = vunpack.c.h.b16 %v298
    %v385 = vunpack.c.l.b16 %v299
    %v386 = vunpack.c.h.b16 %v299
    %v387 = vunpack.c.l.b16 %v300
    %v388 = vunpack.c.h.b16 %v300
    %v389 = vunpack.c.l.b16 %v301
    %v390 = vunpack.c.h.b16 %v301
    %v391 = vunpack.c.l.b16 %v302
    %v392 = vunpack.c.h.b16 %v302
    %v393 = vunpack.c.l.b16 %v303
    %v394 = vunpack.c.h.b16 %v303
    %v395 = vunpack.c.l.b16 %v304
    %v396 = vunpack.c.h.b16 %v304
    %v397 = vunpack.c.l.b16 %v305
    %v398 = vunpack.c.h.b16 %v305
    %v399 = vunpack.c.l.b16 %v306
    %v400 = vunpack.c.h.b16 %v306
    %v401 = vunpack.c.l.b16 %v307
    %v402 = vunpack.c.h.b16 %v307
    %v403 = vunpack.c.l.b16 %v308
    %v404 = vunpack.c.h.b16 %v308
    %v405 = vpack.c.b16 %v345, %v341
    %v406 = vpack.c.b16 %v346, %v342
    %v407 = vpack.c.b16 %v347, %v343
    %v408 = vpack.c.b16 %v348, %v344
    %v409 = vpack.c.b16 %v353, %v349
    %v410 = vpack.c.b16 %v354, %v350
    %v411 = vpack.c.b16 %v355, %v351
    %v412 = vpack.c.b16 %v356, %v352
    %v413 = vpack.c.b16 %v361, %v357
    %v414 = vpack.c.b16 %v362, %v358
    %v415 = vpack.c.b16 %v363, %v359
    %v416 = vpack.c.b16 %v364, %v360
    %v417 = vpack.c.b16 %v369, %v365
    %v418 = vpack.c.b16 %v370, %v366
    %v419 = vpack.c.b16 %v371, %v367
    %v420 = vpack.c.b16 %v372, %v368
    %v421 = vpack.c.b16 %v377, %v373
    %v422 = vpack.c.b16 %v378, %v374
    %v423 = vpack.c.b16 %v379, %v375
    %v424 = vpack.c.b16 %v380, %v376
    %v425 = vpack.c.b16 %v385, %v381
    %v426 = vpack.c.b16 %v386, %v382
    %v427 = vpack.c.b16 %v387, %v383
    %v428 = vpack.c.b16 %v388, %v384
    %v429 = vpack.c.b16 %v393, %v389
    %v430 = vpack.c.b16 %v394, %v390
    %v431 = vpack.c.b16 %v395, %v391
    %v432 = vpack.c.b16 %v396, %v392
    %v433 = vpack.c.b16 %v401, %v397
    %v434 = vpack.c.b16 %v402, %v398
    %v435 = vpack.c.b16 %v403, %v399
    %v436 = vpack.c.b16 %v404, %v400
    %469 = vmatpush.bf16.msra.mxu0 %v433
    %470 = vmatpush.bf16.msra.mxu0 %v429
    %471 = vmatpush.bf16.msra.mxu0 %v425
    %472 = vmatpush.bf16.msra.mxu0 %v421
    %473 = vmatpush.bf16.msra.mxu0 %v417
    %474 = vmatpush.bf16.msra.mxu0 %v413
    %475 = vmatpush.bf16.msra.mxu0 %v409
    %476 = vmatpush.bf16.msra.mxu0 %v405
    %477 = vmatmul.bf16.gmra.mxu0 %v276
    %v478 = vpop.f32.mrf.mxu0
    %v479 = vadd.f32 0.0, %v478
    %v480 = vpop.f32.mrf.mxu0
    %481 = vdwg.mxu0
    %482 = vmatpush.bf16.msra.mxu0 %v434
    %483 = vmatpush.bf16.msra.mxu0 %v430
    %484 = vmatpush.bf16.msra.mxu0 %v426
    %485 = vmatpush.bf16.msra.mxu0 %v422
    %486 = vmatpush.bf16.msra.mxu0 %v418
    %487 = vmatpush.bf16.msra.mxu0 %v414
    %488 = vmatpush.bf16.msra.mxu0 %v410
    %489 = vmatpush.bf16.msra.mxu0 %v406
    %490 = vmatmul.bf16.gmra.mxu0 %v276
    %v491 = vpop.f32.mrf.mxu0
    %v492 = vadd.f32 0.0, %v491
    %v493 = vpop.f32.mrf.mxu0
    %494 = vdwg.mxu0
    %495 = vmatpush.bf16.msra.mxu0 %v435
    %496 = vmatpush.bf16.msra.mxu0 %v431
    %497 = vmatpush.bf16.msra.mxu0 %v427
    %498 = vmatpush.bf16.msra.mxu0 %v423
    %499 = vmatpush.bf16.msra.mxu0 %v419
    %500 = vmatpush.bf16.msra.mxu0 %v415
    %501 = vmatpush.bf16.msra.mxu0 %v411
    %502 = vmatpush.bf16.msra.mxu0 %v407
    %503 = vmatmul.bf16.gmra.mxu0 %v276
    %v504 = vpop.f32.mrf.mxu0
    %v505 = vadd.f32 0.0, %v504
    %v506 = vpop.f32.mrf.mxu0
    %507 = vdwg.mxu0
    %508 = vmatpush.bf16.msra.mxu0 %v436
    %509 = vmatpush.bf16.msra.mxu0 %v432
    %510 = vmatpush.bf16.msra.mxu0 %v428
    %511 = vmatpush.bf16.msra.mxu0 %v424
    %512 = vmatpush.bf16.msra.mxu0 %v420
    %513 = vmatpush.bf16.msra.mxu0 %v416
    %514 = vmatpush.bf16.msra.mxu0 %v412
    %515 = vmatpush.bf16.msra.mxu0 %v408
    %516 = vmatmul.bf16.gmra.mxu0 %v276
    %v517 = vpop.f32.mrf.mxu0
    %v518 = vadd.f32 0.0, %v517
    %v519 = vpop.f32.mrf.mxu0
    %520 = vdwg.mxu0
    %v553 = vunpack.c.l.b16 %v244
    %v554 = vunpack.c.h.b16 %v244
    %v555 = vunpack.c.l.b16 %v245
    %v556 = vunpack.c.h.b16 %v245
    %v557 = vunpack.c.l.b16 %v246
    %v558 = vunpack.c.h.b16 %v246
    %v559 = vunpack.c.l.b16 %v247
    %v560 = vunpack.c.h.b16 %v247
    %v561 = vunpack.c.l.b16 %v248
    %v562 = vunpack.c.h.b16 %v248
    %v563 = vunpack.c.l.b16 %v249
    %v564 = vunpack.c.h.b16 %v249
    %v565 = vunpack.c.l.b16 %v250
    %v566 = vunpack.c.h.b16 %v250
    %v567 = vunpack.c.l.b16 %v251
    %v568 = vunpack.c.h.b16 %v251
    %v569 = vunpack.c.l.b16 %v252
    %v570 = vunpack.c.h.b16 %v252
    %v571 = vunpack.c.l.b16 %v253
    %v572 = vunpack.c.h.b16 %v253
    %v573 = vunpack.c.l.b16 %v254
    %v574 = vunpack.c.h.b16 %v254
    %v575 = vunpack.c.l.b16 %v255
    %v576 = vunpack.c.h.b16 %v255
    %v577 = vunpack.c.l.b16 %v256
    %v578 = vunpack.c.h.b16 %v256
    %v579 = vunpack.c.l.b16 %v257
    %v580 = vunpack.c.h.b16 %v257
    %v581 = vunpack.c.l.b16 %v258
    %v582 = vunpack.c.h.b16 %v258
    %v583 = vunpack.c.l.b16 %v259
    %v584 = vunpack.c.h.b16 %v259
    %v585 = vunpack.c.l.b16 %v260
    %v586 = vunpack.c.h.b16 %v260
    %v587 = vunpack.c.l.b16 %v261
    %v588 = vunpack.c.h.b16 %v261
    %v589 = vunpack.c.l.b16 %v262
    %v590 = vunpack.c.h.b16 %v262
    %v591 = vunpack.c.l.b16 %v263
    %v592 = vunpack.c.h.b16 %v263
    %v593 = vunpack.c.l.b16 %v264
    %v594 = vunpack.c.h.b16 %v264
    %v595 = vunpack.c.l.b16 %v265
    %v596 = vunpack.c.h.b16 %v265
    %v597 = vunpack.c.l.b16 %v266
    %v598 = vunpack.c.h.b16 %v266
    %v599 = vunpack.c.l.b16 %v267
    %v600 = vunpack.c.h.b16 %v267
    %v601 = vunpack.c.l.b16 %v268
    %v602 = vunpack.c.h.b16 %v268
    %v603 = vunpack.c.l.b16 %v269
    %v604 = vunpack.c.h.b16 %v269
    %v605 = vunpack.c.l.b16 %v270
    %v606 = vunpack.c.h.b16 %v270
    %v607 = vunpack.c.l.b16 %v271
    %v608 = vunpack.c.h.b16 %v271
    %v609 = vunpack.c.l.b16 %v272
    %v610 = vunpack.c.h.b16 %v272
    %v611 = vunpack.c.l.b16 %v273
    %v612 = vunpack.c.h.b16 %v273
    %v613 = vunpack.c.l.b16 %v274
    %v614 = vunpack.c.h.b16 %v274
    %v615 = vunpack.c.l.b16 %v275
    %v616 = vunpack.c.h.b16 %v275
    %v617 = vpack.c.b16 %v557, %v553
    %v618 = vpack.c.b16 %v558, %v554
    %v619 = vpack.c.b16 %v559, %v555
    %v620 = vpack.c.b16 %v560, %v556
    %v621 = vpack.c.b16 %v565, %v561
    %v622 = vpack.c.b16 %v566, %v562
    %v623 = vpack.c.b16 %v567, %v563
    %v624 = vpack.c.b16 %v568, %v564
    %v625 = vpack.c.b16 %v573, %v569
    %v626 = vpack.c.b16 %v574, %v570
    %v627 = vpack.c.b16 %v575, %v571
    %v628 = vpack.c.b16 %v576, %v572
    %v629 = vpack.c.b16 %v581, %v577
    %v630 = vpack.c.b16 %v582, %v578
    %v631 = vpack.c.b16 %v583, %v579
    %v632 = vpack.c.b16 %v584, %v580
    %v633 = vpack.c.b16 %v589, %v585
    %v634 = vpack.c.b16 %v590, %v586
    %v635 = vpack.c.b16 %v591, %v587
    %v636 = vpack.c.b16 %v592, %v588
    %v637 = vpack.c.b16 %v597, %v593
    %v638 = vpack.c.b16 %v598, %v594
    %v639 = vpack.c.b16 %v599, %v595
    %v640 = vpack.c.b16 %v600, %v596
    %v641 = vpack.c.b16 %v605, %v601
    %v642 = vpack.c.b16 %v606, %v602
    %v643 = vpack.c.b16 %v607, %v603
    %v644 = vpack.c.b16 %v608, %v604
    %v645 = vpack.c.b16 %v613, %v609
    %v646 = vpack.c.b16 %v614, %v610
    %v647 = vpack.c.b16 %v615, %v611
    %v648 = vpack.c.b16 %v616, %v612
    %681 = vmatpush.bf16.msra.mxu0 %v645
    %682 = vmatpush.bf16.msra.mxu0 %v641
    %683 = vmatpush.bf16.msra.mxu0 %v637
    %684 = vmatpush.bf16.msra.mxu0 %v633
    %685 = vmatpush.bf16.msra.mxu0 %v629
    %686 = vmatpush.bf16.msra.mxu0 %v625
    %687 = vmatpush.bf16.msra.mxu0 %v621
    %688 = vmatpush.bf16.msra.mxu0 %v617
    %689 = vmatmul.bf16.gmra.mxu0 %v243
    %v690 = vpop.f32.mrf.mxu0
    %v691 = vadd.f32 %v479, %v690
    %v692 = vpop.f32.mrf.mxu0
    %693 = vdwg.mxu0
    %694 = vmatpush.bf16.msra.mxu0 %v646
    %695 = vmatpush.bf16.msra.mxu0 %v642
    %696 = vmatpush.bf16.msra.mxu0 %v638
    %697 = vmatpush.bf16.msra.mxu0 %v634
    %698 = vmatpush.bf16.msra.mxu0 %v630
    %699 = vmatpush.bf16.msra.mxu0 %v626
    %700 = vmatpush.bf16.msra.mxu0 %v622
    %701 = vmatpush.bf16.msra.mxu0 %v618
    %702 = vmatmul.bf16.gmra.mxu0 %v243
    %v703 = vpop.f32.mrf.mxu0
    %v704 = vadd.f32 %v492, %v703
    %v705 = vpop.f32.mrf.mxu0
    %706 = vdwg.mxu0
    %707 = vmatpush.bf16.msra.mxu0 %v647
    %708 = vmatpush.bf16.msra.mxu0 %v643
    %709 = vmatpush.bf16.msra.mxu0 %v639
    %710 = vmatpush.bf16.msra.mxu0 %v635
    %711 = vmatpush.bf16.msra.mxu0 %v631
    %712 = vmatpush.bf16.msra.mxu0 %v627
    %713 = vmatpush.bf16.msra.mxu0 %v623
    %714 = vmatpush.bf16.msra.mxu0 %v619
    %715 = vmatmul.bf16.gmra.mxu0 %v243
    %v716 = vpop.f32.mrf.mxu0
    %v717 = vadd.f32 %v505, %v716
    %v718 = vpop.f32.mrf.mxu0
    %719 = vdwg.mxu0
    %720 = vmatpush.bf16.msra.mxu0 %v648
    %721 = vmatpush.bf16.msra.mxu0 %v644
    %722 = vmatpush.bf16.msra.mxu0 %v640
    %723 = vmatpush.bf16.msra.mxu0 %v636
    %724 = vmatpush.bf16.msra.mxu0 %v632
    %725 = vmatpush.bf16.msra.mxu0 %v628
    %726 = vmatpush.bf16.msra.mxu0 %v624
    %727 = vmatpush.bf16.msra.mxu0 %v620
    %728 = vmatmul.bf16.gmra.mxu0 %v243
    %v729 = vpop.f32.mrf.mxu0
    %v730 = vadd.f32 %v518, %v729
    %v731 = vpop.f32.mrf.mxu0
    %732 = vdwg.mxu0
    %v733 = vld [vmem:[%s8] sm:$0xf]
    %v735 = vperm.slane %v733, 0
    %v736 = vperm.slane %v733, 1
    %v737 = vperm.slane %v733, 2
    %v738 = vperm.slane %v733, 3
    %v743 = vadd.f32 %v691, %v735
    %v744 = vadd.f32 %v704, %v736
    %v745 = vadd.f32 %v717, %v737
    %v746 = vadd.f32 %v730, %v738
    %v747 = vxor.u32 %v743, 2147483648
    %v748 = vmul.f32 %v747, 1.442695
    %v749 = vpow.pop %v748
    %v750 = vadd.f32 %v749, 1.0
    %v751 = vrcp.pop %v750
    %v752 = vmul.f32 %v750, %v751
    %v753 = vsub.f32 1.0, %v752
    %v754 = vmul.f32 %v751, %v753
    %v755 = vadd.f32 %v751, %v754
    %vm756 = vweird.f32 %v750
    %vm757 = vweird.f32 %v751
    %vm758 = vmor %vm756, %vm757
    %v759 = vsel %vm758, %v751, %v755
    %v760 = vand.u32 2147483647, %v750
    %vm761 = vcmp.eq.f32.partialorder %v760, 8.507059e+37
    %v762 = vand.u32 %v750, 2147483648
    %v763 = vor.u32 1.1754944e-38, %v762
    %v764 = vsel %vm761, %v763, %v759
    %v765 = vmul.f32 1.0, %v764
    %v766 = vxor.u32 %v744, 2147483648
    %v767 = vmul.f32 %v766, 1.442695
    %v768 = vpow.pop %v767
    %v769 = vadd.f32 %v768, 1.0
    %v770 = vrcp.pop %v769
    %v771 = vmul.f32 %v769, %v770
    %v772 = vsub.f32 1.0, %v771
    %v773 = vmul.f32 %v770, %v772
    %v774 = vadd.f32 %v770, %v773
    %vm775 = vweird.f32 %v769
    %vm776 = vweird.f32 %v770
    %vm777 = vmor %vm775, %vm776
    %v778 = vsel %vm777, %v770, %v774
    %v779 = vand.u32 2147483647, %v769
    %vm780 = vcmp.eq.f32.partialorder %v779, 8.507059e+37
    %v781 = vand.u32 %v769, 2147483648
    %v782 = vor.u32 1.1754944e-38, %v781
    %v783 = vsel %vm780, %v782, %v778
    %v784 = vmul.f32 1.0, %v783
    %v785 = vtanh.pop %v745
    %v786 = vxor.u32 %v746, 2147483648
    %v787 = vmul.f32 %v786, 1.442695
    %v788 = vpow.pop %v787
    %v789 = vadd.f32 %v788, 1.0
    %v790 = vrcp.pop %v789
    %v791 = vmul.f32 %v789, %v790
    %v792 = vsub.f32 1.0, %v791
    %v793 = vmul.f32 %v790, %v792
    %v794 = vadd.f32 %v790, %v793
    %vm795 = vweird.f32 %v789
    %vm796 = vweird.f32 %v790
    %vm797 = vmor %vm795, %vm796
    %v798 = vsel %vm797, %v790, %v794
    %v799 = vand.u32 2147483647, %v789
    %vm800 = vcmp.eq.f32.partialorder %v799, 8.507059e+37
    %v801 = vand.u32 %v789, 2147483648
    %v802 = vor.u32 1.1754944e-38, %v801
    %v803 = vsel %vm800, %v802, %v798
    %v804 = vmul.f32 1.0, %v803
    %v805 = vmul.f32 %v784, %v242
    %v806 = vmul.f32 %v765, %v785
    %v807 = vadd.f32 %v805, %v806
    %v808 = vtanh.pop %v807
    %v809 = vmul.f32 %v804, %v808
    %810 = vst [vmem:[#allocation15] sm:$0xff] %v809
    %811 = vst [vmem:[#allocation17] sm:$0xff] %v807
    %s812 = scalar_lea.vmem [#allocation2], 8
    %v813 = vld [vmem:[%s812] sm:$0xff]
    %s814 = scalar_lea.vmem [#allocation5], 8
    %v815 = vld [vmem:[%s814] sm:$0xff]
    %v816 = vpack.c.bf16 %v809, %v809
    %v817 = vld [vmem:[#allocation8] sm:$0xff]
    %v818 = vld [vmem:[#allocation8 + $0x8] sm:$0xff]
    %v819 = vld [vmem:[#allocation8 + $0x10] sm:$0xff]
    %v820 = vld [vmem:[#allocation8 + $0x18] sm:$0xff]
    %v821 = vld [vmem:[#allocation8 + $0x20] sm:$0xff]
    %v822 = vld [vmem:[#allocation8 + $0x28] sm:$0xff]
    %v823 = vld [vmem:[#allocation8 + $0x30] sm:$0xff]
    %v824 = vld [vmem:[#allocation8 + $0x38] sm:$0xff]
    %v825 = vld [vmem:[#allocation8 + $0x40] sm:$0xff]
    %v826 = vld [vmem:[#allocation8 + $0x48] sm:$0xff]
    %v827 = vld [vmem:[#allocation8 + $0x50] sm:$0xff]
    %v828 = vld [vmem:[#allocation8 + $0x58] sm:$0xff]
    %v829 = vld [vmem:[#allocation8 + $0x60] sm:$0xff]
    %v830 = vld [vmem:[#allocation8 + $0x68] sm:$0xff]
    %v831 = vld [vmem:[#allocation8 + $0x70] sm:$0xff]
    %v832 = vld [vmem:[#allocation8 + $0x78] sm:$0xff]
    %v833 = vld [vmem:[#allocation8 + $0x80] sm:$0xff]
    %v834 = vld [vmem:[#allocation8 + $0x88] sm:$0xff]
    %v835 = vld [vmem:[#allocation8 + $0x90] sm:$0xff]
    %v836 = vld [vmem:[#allocation8 + $0x98] sm:$0xff]
    %v837 = vld [vmem:[#allocation8 + $0xa0] sm:$0xff]
    %v838 = vld [vmem:[#allocation8 + $0xa8] sm:$0xff]
    %v839 = vld [vmem:[#allocation8 + $0xb0] sm:$0xff]
    %v840 = vld [vmem:[#allocation8 + $0xb8] sm:$0xff]
    %v841 = vld [vmem:[#allocation8 + $0xc0] sm:$0xff]
    %v842 = vld [vmem:[#allocation8 + $0xc8] sm:$0xff]
    %v843 = vld [vmem:[#allocation8 + $0xd0] sm:$0xff]
    %v844 = vld [vmem:[#allocation8 + $0xd8] sm:$0xff]
    %v845 = vld [vmem:[#allocation8 + $0xe0] sm:$0xff]
    %v846 = vld [vmem:[#allocation8 + $0xe8] sm:$0xff]
    %v847 = vld [vmem:[#allocation8 + $0xf0] sm:$0xff]
    %v848 = vld [vmem:[#allocation8 + $0xf8] sm:$0xff]
    %v849 = vpack.c.bf16 %v813, %v813
    %v850 = vld [vmem:[#allocation11] sm:$0xff]
    %v851 = vld [vmem:[#allocation11 + $0x8] sm:$0xff]
    %v852 = vld [vmem:[#allocation11 + $0x10] sm:$0xff]
    %v853 = vld [vmem:[#allocation11 + $0x18] sm:$0xff]
    %v854 = vld [vmem:[#allocation11 + $0x20] sm:$0xff]
    %v855 = vld [vmem:[#allocation11 + $0x28] sm:$0xff]
    %v856 = vld [vmem:[#allocation11 + $0x30] sm:$0xff]
    %v857 = vld [vmem:[#allocation11 + $0x38] sm:$0xff]
    %v858 = vld [vmem:[#allocation11 + $0x40] sm:$0xff]
    %v859 = vld [vmem:[#allocation11 + $0x48] sm:$0xff]
    %v860 = vld [vmem:[#allocation11 + $0x50] sm:$0xff]
    %v861 = vld [vmem:[#allocation11 + $0x58] sm:$0xff]
    %v862 = vld [vmem:[#allocation11 + $0x60] sm:$0xff]
    %v863 = vld [vmem:[#allocation11 + $0x68] sm:$0xff]
    %v864 = vld [vmem:[#allocation11 + $0x70] sm:$0xff]
    %v865 = vld [vmem:[#allocation11 + $0x78] sm:$0xff]
    %v866 = vld [vmem:[#allocation11 + $0x80] sm:$0xff]
    %v867 = vld [vmem:[#allocation11 + $0x88] sm:$0xff]
    %v868 = vld [vmem:[#allocation11 + $0x90] sm:$0xff]
    %v869 = vld [vmem:[#allocation11 + $0x98] sm:$0xff]
    %v870 = vld [vmem:[#allocation11 + $0xa0] sm:$0xff]
    %v871 = vld [vmem:[#allocation11 + $0xa8] sm:$0xff]
    %v872 = vld [vmem:[#allocation11 + $0xb0] sm:$0xff]
    %v873 = vld [vmem:[#allocation11 + $0xb8] sm:$0xff]
    %v874 = vld [vmem:[#allocation11 + $0xc0] sm:$0xff]
    %v875 = vld [vmem:[#allocation11 + $0xc8] sm:$0xff]
    %v876 = vld [vmem:[#allocation11 + $0xd0] sm:$0xff]
    %v877 = vld [vmem:[#allocation11 + $0xd8] sm:$0xff]
    %v878 = vld [vmem:[#allocation11 + $0xe0] sm:$0xff]
    %v879 = vld [vmem:[#allocation11 + $0xe8] sm:$0xff]
    %v880 = vld [vmem:[#allocation11 + $0xf0] sm:$0xff]
    %v881 = vld [vmem:[#allocation11 + $0xf8] sm:$0xff]
    %v914 = vunpack.c.l.b16 %v850
    %v915 = vunpack.c.h.b16 %v850
    %v916 = vunpack.c.l.b16 %v851
    %v917 = vunpack.c.h.b16 %v851
    %v918 = vunpack.c.l.b16 %v852
    %v919 = vunpack.c.h.b16 %v852
    %v920 = vunpack.c.l.b16 %v853
    %v921 = vunpack.c.h.b16 %v853
    %v922 = vunpack.c.l.b16 %v854
    %v923 = vunpack.c.h.b16 %v854
    %v924 = vunpack.c.l.b16 %v855
    %v925 = vunpack.c.h.b16 %v855
    %v926 = vunpack.c.l.b16 %v856
    %v927 = vunpack.c.h.b16 %v856
    %v928 = vunpack.c.l.b16 %v857
    %v929 = vunpack.c.h.b16 %v857
    %v930 = vunpack.c.l.b16 %v858
    %v931 = vunpack.c.h.b16 %v858
    %v932 = vunpack.c.l.b16 %v859
    %v933 = vunpack.c.h.b16 %v859
    %v934 = vunpack.c.l.b16 %v860
    %v935 = vunpack.c.h.b16 %v860
    %v936 = vunpack.c.l.b16 %v861
    %v937 = vunpack.c.h.b16 %v861
    %v938 = vunpack.c.l.b16 %v862
    %v939 = vunpack.c.h.b16 %v862
    %v940 = vunpack.c.l.b16 %v863
    %v941 = vunpack.c.h.b16 %v863
    %v942 = vunpack.c.l.b16 %v864
    %v943 = vunpack.c.h.b16 %v864
    %v944 = vunpack.c.l.b16 %v865
    %v945 = vunpack.c.h.b16 %v865
    %v946 = vunpack.c.l.b16 %v866
    %v947 = vunpack.c.h.b16 %v866
    %v948 = vunpack.c.l.b16 %v867
    %v949 = vunpack.c.h.b16 %v867
    %v950 = vunpack.c.l.b16 %v868
    %v951 = vunpack.c.h.b16 %v868
    %v952 = vunpack.c.l.b16 %v869
    %v953 = vunpack.c.h.b16 %v869
    %v954 = vunpack.c.l.b16 %v870
    %v955 = vunpack.c.h.b16 %v870
    %v956 = vunpack.c.l.b16 %v871
    %v957 = vunpack.c.h.b16 %v871
    %v958 = vunpack.c.l.b16 %v872
    %v959 = vunpack.c.h.b16 %v872
    %v960 = vunpack.c.l.b16 %v873
    %v961 = vunpack.c.h.b16 %v873
    %v962 = vunpack.c.l.b16 %v874
    %v963 = vunpack.c.h.b16 %v874
    %v964 = vunpack.c.l.b16 %v875
    %v965 = vunpack.c.h.b16 %v875
    %v966 = vunpack.c.l.b16 %v876
    %v967 = vunpack.c.h.b16 %v876
    %v968 = vunpack.c.l.b16 %v877
    %v969 = vunpack.c.h.b16 %v877
    %v970 = vunpack.c.l.b16 %v878
    %v971 = vunpack.c.h.b16 %v878
    %v972 = vunpack.c.l.b16 %v879
    %v973 = vunpack.c.h.b16 %v879
    %v974 = vunpack.c.l.b16 %v880
    %v975 = vunpack.c.h.b16 %v880
    %v976 = vunpack.c.l.b16 %v881
    %v977 = vunpack.c.h.b16 %v881
    %v978 = vpack.c.b16 %v918, %v914
    %v979 = vpack.c.b16 %v919, %v915
    %v980 = vpack.c.b16 %v920, %v916
    %v981 = vpack.c.b16 %v921, %v917
    %v982 = vpack.c.b16 %v926, %v922
    %v983 = vpack.c.b16 %v927, %v923
    %v984 = vpack.c.b16 %v928, %v924
    %v985 = vpack.c.b16 %v929, %v925
    %v986 = vpack.c.b16 %v934, %v930
    %v987 = vpack.c.b16 %v935, %v931
    %v988 = vpack.c.b16 %v936, %v932
    %v989 = vpack.c.b16 %v937, %v933
    %v990 = vpack.c.b16 %v942, %v938
    %v991 = vpack.c.b16 %v943, %v939
    %v992 = vpack.c.b16 %v944, %v940
    %v993 = vpack.c.b16 %v945, %v941
    %v994 = vpack.c.b16 %v950, %v946
    %v995 = vpack.c.b16 %v951, %v947
    %v996 = vpack.c.b16 %v952, %v948
    %v997 = vpack.c.b16 %v953, %v949
    %v998 = vpack.c.b16 %v958, %v954
    %v999 = vpack.c.b16 %v959, %v955
    %v1000 = vpack.c.b16 %v960, %v956
    %v1001 = vpack.c.b16 %v961, %v957
    %v1002 = vpack.c.b16 %v966, %v962
    %v1003 = vpack.c.b16 %v967, %v963
    %v1004 = vpack.c.b16 %v968, %v964
    %v1005 = vpack.c.b16 %v969, %v965
    %v1006 = vpack.c.b16 %v974, %v970
    %v1007 = vpack.c.b16 %v975, %v971
    %v1008 = vpack.c.b16 %v976, %v972
    %v1009 = vpack.c.b16 %v977, %v973
    %1042 = vmatpush.bf16.msra.mxu0 %v1006
    %1043 = vmatpush.bf16.msra.mxu0 %v1002
    %1044 = vmatpush.bf16.msra.mxu0 %v998
    %1045 = vmatpush.bf16.msra.mxu0 %v994
    %1046 = vmatpush.bf16.msra.mxu0 %v990
    %1047 = vmatpush.bf16.msra.mxu0 %v986
    %1048 = vmatpush.bf16.msra.mxu0 %v982
    %1049 = vmatpush.bf16.msra.mxu0 %v978
    %1050 = vmatmul.bf16.gmra.mxu0 %v849
    %v1051 = vpop.f32.mrf.mxu0
    %v1052 = vadd.f32 0.0, %v1051
    %v1053 = vpop.f32.mrf.mxu0
    %1054 = vdwg.mxu0
    %1055 = vmatpush.bf16.msra.mxu0 %v1007
    %1056 = vmatpush.bf16.msra.mxu0 %v1003
    %1057 = vmatpush.bf16.msra.mxu0 %v999
    %1058 = vmatpush.bf16.msra.mxu0 %v995
    %1059 = vmatpush.bf16.msra.mxu0 %v991
    %1060 = vmatpush.bf16.msra.mxu0 %v987
    %1061 = vmatpush.bf16.msra.mxu0 %v983
    %1062 = vmatpush.bf16.msra.mxu0 %v979
    %1063 = vmatmul.bf16.gmra.mxu0 %v849
    %v1064 = vpop.f32.mrf.mxu0
    %v1065 = vadd.f32 0.0, %v1064
    %v1066 = vpop.f32.mrf.mxu0
    %1067 = vdwg.mxu0
    %1068 = vmatpush.bf16.msra.mxu0 %v1008
    %1069 = vmatpush.bf16.msra.mxu0 %v1004
    %1070 = vmatpush.bf16.msra.mxu0 %v1000
    %1071 = vmatpush.bf16.msra.mxu0 %v996
    %1072 = vmatpush.bf16.msra.mxu0 %v992
    %1073 = vmatpush.bf16.msra.mxu0 %v988
    %1074 = vmatpush.bf16.msra.mxu0 %v984
    %1075 = vmatpush.bf16.msra.mxu0 %v980
    %1076 = vmatmul.bf16.gmra.mxu0 %v849
    %v1077 = vpop.f32.mrf.mxu0
    %v1078 = vadd.f32 0.0, %v1077
    %v1079 = vpop.f32.mrf.mxu0
    %1080 = vdwg.mxu0
    %1081 = vmatpush.bf16.msra.mxu0 %v1009
    %1082 = vmatpush.bf16.msra.mxu0 %v1005
    %1083 = vmatpush.bf16.msra.mxu0 %v1001
    %1084 = vmatpush.bf16.msra.mxu0 %v997
    %1085 = vmatpush.bf16.msra.mxu0 %v993
    %1086 = vmatpush.bf16.msra.mxu0 %v989
    %1087 = vmatpush.bf16.msra.mxu0 %v985
    %1088 = vmatpush.bf16.msra.mxu0 %v981
    %1089 = vmatmul.bf16.gmra.mxu0 %v849
    %v1090 = vpop.f32.mrf.mxu0
    %v1091 = vadd.f32 0.0, %v1090
    %v1092 = vpop.f32.mrf.mxu0
    %1093 = vdwg.mxu0
    %v1126 = vunpack.c.l.b16 %v817
    %v1127 = vunpack.c.h.b16 %v817
    %v1128 = vunpack.c.l.b16 %v818
    %v1129 = vunpack.c.h.b16 %v818
    %v1130 = vunpack.c.l.b16 %v819
    %v1131 = vunpack.c.h.b16 %v819
    %v1132 = vunpack.c.l.b16 %v820
    %v1133 = vunpack.c.h.b16 %v820
    %v1134 = vunpack.c.l.b16 %v821
    %v1135 = vunpack.c.h.b16 %v821
    %v1136 = vunpack.c.l.b16 %v822
    %v1137 = vunpack.c.h.b16 %v822
    %v1138 = vunpack.c.l.b16 %v823
    %v1139 = vunpack.c.h.b16 %v823
    %v1140 = vunpack.c.l.b16 %v824
    %v1141 = vunpack.c.h.b16 %v824
    %v1142 = vunpack.c.l.b16 %v825
    %v1143 = vunpack.c.h.b16 %v825
    %v1144 = vunpack.c.l.b16 %v826
    %v1145 = vunpack.c.h.b16 %v826
    %v1146 = vunpack.c.l.b16 %v827
    %v1147 = vunpack.c.h.b16 %v827
    %v1148 = vunpack.c.l.b16 %v828
    %v1149 = vunpack.c.h.b16 %v828
    %v1150 = vunpack.c.l.b16 %v829
    %v1151 = vunpack.c.h.b16 %v829
    %v1152 = vunpack.c.l.b16 %v830
    %v1153 = vunpack.c.h.b16 %v830
    %v1154 = vunpack.c.l.b16 %v831
    %v1155 = vunpack.c.h.b16 %v831
    %v1156 = vunpack.c.l.b16 %v832
    %v1157 = vunpack.c.h.b16 %v832
    %v1158 = vunpack.c.l.b16 %v833
    %v1159 = vunpack.c.h.b16 %v833
    %v1160 = vunpack.c.l.b16 %v834
    %v1161 = vunpack.c.h.b16 %v834
    %v1162 = vunpack.c.l.b16 %v835
    %v1163 = vunpack.c.h.b16 %v835
    %v1164 = vunpack.c.l.b16 %v836
    %v1165 = vunpack.c.h.b16 %v836
    %v1166 = vunpack.c.l.b16 %v837
    %v1167 = vunpack.c.h.b16 %v837
    %v1168 = vunpack.c.l.b16 %v838
    %v1169 = vunpack.c.h.b16 %v838
    %v1170 = vunpack.c.l.b16 %v839
    %v1171 = vunpack.c.h.b16 %v839
    %v1172 = vunpack.c.l.b16 %v840
    %v1173 = vunpack.c.h.b16 %v840
    %v1174 = vunpack.c.l.b16 %v841
    %v1175 = vunpack.c.h.b16 %v841
    %v1176 = vunpack.c.l.b16 %v842
    %v1177 = vunpack.c.h.b16 %v842
    %v1178 = vunpack.c.l.b16 %v843
    %v1179 = vunpack.c.h.b16 %v843
    %v1180 = vunpack.c.l.b16 %v844
    %v1181 = vunpack.c.h.b16 %v844
    %v1182 = vunpack.c.l.b16 %v845
    %v1183 = vunpack.c.h.b16 %v845
    %v1184 = vunpack.c.l.b16 %v846
    %v1185 = vunpack.c.h.b16 %v846
    %v1186 = vunpack.c.l.b16 %v847
    %v1187 = vunpack.c.h.b16 %v847
    %v1188 = vunpack.c.l.b16 %v848
    %v1189 = vunpack.c.h.b16 %v848
    %v1190 = vpack.c.b16 %v1130, %v1126
    %v1191 = vpack.c.b16 %v1131, %v1127
    %v1192 = vpack.c.b16 %v1132, %v1128
    %v1193 = vpack.c.b16 %v1133, %v1129
    %v1194 = vpack.c.b16 %v1138, %v1134
    %v1195 = vpack.c.b16 %v1139, %v1135
    %v1196 = vpack.c.b16 %v1140, %v1136
    %v1197 = vpack.c.b16 %v1141, %v1137
    %v1198 = vpack.c.b16 %v1146, %v1142
    %v1199 = vpack.c.b16 %v1147, %v1143
    %v1200 = vpack.c.b16 %v1148, %v1144
    %v1201 = vpack.c.b16 %v1149, %v1145
    %v1202 = vpack.c.b16 %v1154, %v1150
    %v1203 = vpack.c.b16 %v1155, %v1151
    %v1204 = vpack.c.b16 %v1156, %v1152
    %v1205 = vpack.c.b16 %v1157, %v1153
    %v1206 = vpack.c.b16 %v1162, %v1158
    %v1207 = vpack.c.b16 %v1163, %v1159
    %v1208 = vpack.c.b16 %v1164, %v1160
    %v1209 = vpack.c.b16 %v1165, %v1161
    %v1210 = vpack.c.b16 %v1170, %v1166
    %v1211 = vpack.c.b16 %v1171, %v1167
    %v1212 = vpack.c.b16 %v1172, %v1168
    %v1213 = vpack.c.b16 %v1173, %v1169
    %v1214 = vpack.c.b16 %v1178, %v1174
    %v1215 = vpack.c.b16 %v1179, %v1175
    %v1216 = vpack.c.b16 %v1180, %v1176
    %v1217 = vpack.c.b16 %v1181, %v1177
    %v1218 = vpack.c.b16 %v1186, %v1182
    %v1219 = vpack.c.b16 %v1187, %v1183
    %v1220 = vpack.c.b16 %v1188, %v1184
    %v1221 = vpack.c.b16 %v1189, %v1185
    %1254 = vmatpush.bf16.msra.mxu0 %v1218
    %1255 = vmatpush.bf16.msra.mxu0 %v1214
    %1256 = vmatpush.bf16.msra.mxu0 %v1210
    %1257 = vmatpush.bf16.msra.mxu0 %v1206
    %1258 = vmatpush.bf16.msra.mxu0 %v1202
    %1259 = vmatpush.bf16.msra.mxu0 %v1198
    %1260 = vmatpush.bf16.msra.mxu0 %v1194
    %1261 = vmatpush.bf16.msra.mxu0 %v1190
    %1262 = vmatmul.bf16.gmra.mxu0 %v816
    %v1263 = vpop.f32.mrf.mxu0
    %v1264 = vadd.f32 %v1052, %v1263
    %v1265 = vpop.f32.mrf.mxu0
    %1266 = vdwg.mxu0
    %1267 = vmatpush.bf16.msra.mxu0 %v1219
    %1268 = vmatpush.bf16.msra.mxu0 %v1215
    %1269 = vmatpush.bf16.msra.mxu0 %v1211
    %1270 = vmatpush.bf16.msra.mxu0 %v1207
    %1271 = vmatpush.bf16.msra.mxu0 %v1203
    %1272 = vmatpush.bf16.msra.mxu0 %v1199
    %1273 = vmatpush.bf16.msra.mxu0 %v1195
    %1274 = vmatpush.bf16.msra.mxu0 %v1191
    %1275 = vmatmul.bf16.gmra.mxu0 %v816
    %v1276 = vpop.f32.mrf.mxu0
    %v1277 = vadd.f32 %v1065, %v1276
    %v1278 = vpop.f32.mrf.mxu0
    %1279 = vdwg.mxu0
    %1280 = vmatpush.bf16.msra.mxu0 %v1220
    %1281 = vmatpush.bf16.msra.mxu0 %v1216
    %1282 = vmatpush.bf16.msra.mxu0 %v1212
    %1283 = vmatpush.bf16.msra.mxu0 %v1208
    %1284 = vmatpush.bf16.msra.mxu0 %v1204
    %1285 = vmatpush.bf16.msra.mxu0 %v1200
    %1286 = vmatpush.bf16.msra.mxu0 %v1196
    %1287 = vmatpush.bf16.msra.mxu0 %v1192
    %1288 = vmatmul.bf16.gmra.mxu0 %v816
    %v1289 = vpop.f32.mrf.mxu0
    %v1290 = vadd.f32 %v1078, %v1289
    %v1291 = vpop.f32.mrf.mxu0
    %1292 = vdwg.mxu0
    %1293 = vmatpush.bf16.msra.mxu0 %v1221
    %1294 = vmatpush.bf16.msra.mxu0 %v1217
    %1295 = vmatpush.bf16.msra.mxu0 %v1213
    %1296 = vmatpush.bf16.msra.mxu0 %v1209
    %1297 = vmatpush.bf16.msra.mxu0 %v1205
    %1298 = vmatpush.bf16.msra.mxu0 %v1201
    %1299 = vmatpush.bf16.msra.mxu0 %v1197
    %1300 = vmatpush.bf16.msra.mxu0 %v1193
    %1301 = vmatmul.bf16.gmra.mxu0 %v816
    %v1302 = vpop.f32.mrf.mxu0
    %v1303 = vadd.f32 %v1091, %v1302
    %v1304 = vpop.f32.mrf.mxu0
    %1305 = vdwg.mxu0
    %v1306 = vld [vmem:[%s9] sm:$0xf]
    %v1308 = vperm.slane %v1306, 0
    %v1309 = vperm.slane %v1306, 1
    %v1310 = vperm.slane %v1306, 2
    %v1311 = vperm.slane %v1306, 3
    %v1316 = vadd.f32 %v1264, %v1308
    %v1317 = vadd.f32 %v1277, %v1309
    %v1318 = vadd.f32 %v1290, %v1310
    %v1319 = vadd.f32 %v1303, %v1311
    %v1320 = vxor.u32 %v1316, 2147483648
    %v1321 = vmul.f32 %v1320, 1.442695
    %v1322 = vpow.pop %v1321
    %v1323 = vadd.f32 %v1322, 1.0
    %v1324 = vrcp.pop %v1323
    %v1325 = vmul.f32 %v1323, %v1324
    %v1326 = vsub.f32 1.0, %v1325
    %v1327 = vmul.f32 %v1324, %v1326
    %v1328 = vadd.f32 %v1324, %v1327
    %vm1329 = vweird.f32 %v1323
    %vm1330 = vweird.f32 %v1324
    %vm1331 = vmor %vm1329, %vm1330
    %v1332 = vsel %vm1331, %v1324, %v1328
    %v1333 = vand.u32 2147483647, %v1323
    %vm1334 = vcmp.eq.f32.partialorder %v1333, 8.507059e+37
    %v1335 = vand.u32 %v1323, 2147483648
    %v1336 = vor.u32 1.1754944e-38, %v1335
    %v1337 = vsel %vm1334, %v1336, %v1332
    %v1338 = vmul.f32 1.0, %v1337
    %v1339 = vxor.u32 %v1317, 2147483648
    %v1340 = vmul.f32 %v1339, 1.442695
    %v1341 = vpow.pop %v1340
    %v1342 = vadd.f32 %v1341, 1.0
    %v1343 = vrcp.pop %v1342
    %v1344 = vmul.f32 %v1342, %v1343
    %v1345 = vsub.f32 1.0, %v1344
    %v1346 = vmul.f32 %v1343, %v1345
    %v1347 = vadd.f32 %v1343, %v1346
    %vm1348 = vweird.f32 %v1342
    %vm1349 = vweird.f32 %v1343
    %vm1350 = vmor %vm1348, %vm1349
    %v1351 = vsel %vm1350, %v1343, %v1347
    %v1352 = vand.u32 2147483647, %v1342
    %vm1353 = vcmp.eq.f32.partialorder %v1352, 8.507059e+37
    %v1354 = vand.u32 %v1342, 2147483648
    %v1355 = vor.u32 1.1754944e-38, %v1354
    %v1356 = vsel %vm1353, %v1355, %v1351
    %v1357 = vmul.f32 1.0, %v1356
    %v1358 = vtanh.pop %v1318
    %v1359 = vxor.u32 %v1319, 2147483648
    %v1360 = vmul.f32 %v1359, 1.442695
    %v1361 = vpow.pop %v1360
    %v1362 = vadd.f32 %v1361, 1.0
    %v1363 = vrcp.pop %v1362
    %v1364 = vmul.f32 %v1362, %v1363
    %v1365 = vsub.f32 1.0, %v1364
    %v1366 = vmul.f32 %v1363, %v1365
    %v1367 = vadd.f32 %v1363, %v1366
    %vm1368 = vweird.f32 %v1362
    %vm1369 = vweird.f32 %v1363
    %vm1370 = vmor %vm1368, %vm1369
    %v1371 = vsel %vm1370, %v1363, %v1367
    %v1372 = vand.u32 2147483647, %v1362
    %vm1373 = vcmp.eq.f32.partialorder %v1372, 8.507059e+37
    %v1374 = vand.u32 %v1362, 2147483648
    %v1375 = vor.u32 1.1754944e-38, %v1374
    %v1376 = vsel %vm1373, %v1375, %v1371
    %v1377 = vmul.f32 1.0, %v1376
    %v1378 = vmul.f32 %v1357, %v815
    %v1379 = vmul.f32 %v1338, %v1358
    %v1380 = vadd.f32 %v1378, %v1379
    %v1381 = vtanh.pop %v1380
    %v1382 = vmul.f32 %v1377, %v1381
    %s1383 = scalar_lea.vmem [#allocation15], 8
    %1384 = vst [vmem:[%s1383] sm:$0xff] %v1382
    %s1385 = scalar_lea.vmem [#allocation17], 8
    %1386 = vst [vmem:[%s1385] sm:$0xff] %v1380
    %v1387 = vpack.c.bf16 %v1382, %v1382
    %v1388 = vld [vmem:[#allocation13] sm:$0xf]
    %v1389 = vld [vmem:[#allocation13 + $0x4] sm:$0xf]
    %v1390 = vld [vmem:[#allocation13 + $0x8] sm:$0xf]
    %v1391 = vld [vmem:[#allocation13 + $0xc] sm:$0xf]
    %v1392 = vld [vmem:[#allocation13 + $0x10] sm:$0xf]
    %v1393 = vld [vmem:[#allocation13 + $0x14] sm:$0xf]
    %v1394 = vld [vmem:[#allocation13 + $0x18] sm:$0xf]
    %v1395 = vld [vmem:[#allocation13 + $0x1c] sm:$0xf]
    %v1396 = vld [vmem:[#allocation13 + $0x20] sm:$0xf]
    %v1397 = vld [vmem:[#allocation13 + $0x24] sm:$0xf]
    %v1398 = vld [vmem:[#allocation13 + $0x28] sm:$0xf]
    %v1399 = vld [vmem:[#allocation13 + $0x2c] sm:$0xf]
    %v1400 = vld [vmem:[#allocation13 + $0x30] sm:$0xf]
    %v1401 = vld [vmem:[#allocation13 + $0x34] sm:$0xf]
    %v1402 = vld [vmem:[#allocation13 + $0x38] sm:$0xf]
    %v1403 = vld [vmem:[#allocation13 + $0x3c] sm:$0xf]
    %v1404 = vld [vmem:[%s11] sm:$0x1]
    %v1406 = vperm.slane %v1404, 0
    %v1424 = vunpack.c.l.b16 %v1388
    %v1425 = vunpack.c.l.b16 %v1389
    %v1426 = vunpack.c.l.b16 %v1390
    %v1427 = vunpack.c.l.b16 %v1391
    %v1428 = vunpack.c.l.b16 %v1392
    %v1429 = vunpack.c.l.b16 %v1393
    %v1430 = vunpack.c.l.b16 %v1394
    %v1431 = vunpack.c.l.b16 %v1395
    %v1432 = vunpack.c.l.b16 %v1396
    %v1433 = vunpack.c.l.b16 %v1397
    %v1434 = vunpack.c.l.b16 %v1398
    %v1435 = vunpack.c.l.b16 %v1399
    %v1436 = vunpack.c.l.b16 %v1400
    %v1437 = vunpack.c.l.b16 %v1401
    %v1438 = vunpack.c.l.b16 %v1402
    %v1439 = vunpack.c.l.b16 %v1403
    %v1440 = vpack.c.b16 %v1425, %v1424
    %v1441 = vpack.c.b16 %v1427, %v1426
    %v1442 = vpack.c.b16 %v1429, %v1428
    %v1443 = vpack.c.b16 %v1431, %v1430
    %v1444 = vpack.c.b16 %v1433, %v1432
    %v1445 = vpack.c.b16 %v1435, %v1434
    %v1446 = vpack.c.b16 %v1437, %v1436
    %v1447 = vpack.c.b16 %v1439, %v1438
    %1456 = vmatpush.bf16.msra.mxu0 %v1447
    %1457 = vmatpush.bf16.msra.mxu0 %v1446
    %1458 = vmatpush.bf16.msra.mxu0 %v1445
    %1459 = vmatpush.bf16.msra.mxu0 %v1444
    %1460 = vmatpush.bf16.msra.mxu0 %v1443
    %1461 = vmatpush.bf16.msra.mxu0 %v1442
    %1462 = vmatpush.bf16.msra.mxu0 %v1441
    %1463 = vmatpush.bf16.msra.mxu0 %v1440
    %1464 = vmatmul.bf16.gmra.mxu0 %v1387
    %v1465 = vpop.f32.mrf.mxu0
    %v1466 = vadd.f32 %v1406, %v1465
    %v1467 = vpop.f32.mrf.mxu0
    %1468 = vdwg.mxu0
    %1469 = vst [vmem:[#allocation14] sm:$0xff] %v1466
    // Predicated region
    $region78: #{tpu_custom_call.1} parent=1 // pred_check
      _
    $region79: #{tpu_custom_call.1} parent=1 // pred_check_branch
      %1471 = sbr.rel (0) target = $region81
    $region80: #{tpu_custom_call.1} parent=1 // pred_region
      %1473 = vsyncadd [#allocation4], 0
      %s1475 = sshll.u32 [#allocation14], 4
      %s1476 = int_to_ptr.vmem [resolvable:$true] %s1475
      %s1477 = sshll.u32 %s12, 4
      %s1478 = int_to_ptr.hbm [resolvable:$true] %s1477
      %1480 = dma.vmem_to_hbm [thread:$0]  %s1476, 128, %s1478, [#allocation4]
    $region81: #{tpu_custom_call.1} parent=1 // pred_fallthru
      _
    // Predicated region
    $region82: #{tpu_custom_call.1} parent=1 // pred_check
      _
    $region83: #{tpu_custom_call.1} parent=1 // pred_check_branch
      %1482 = sbr.rel (0) target = $region85
    $region84: #{tpu_custom_call.1} parent=1 // pred_region
      %1484 = vsyncadd [#allocation16], 0
      %s1485 = sshll.u32 [#allocation15], 4
      %s1486 = int_to_ptr.vmem [resolvable:$true] %s1485
      %s1487 = sshll.u32 %s13, 4
      %s1488 = int_to_ptr.hbm [resolvable:$true] %s1487
      %1493 = dma.vmem_to_hbm [thread:$0]  %s1486, 256, %s1488, [#allocation16], 128, 128, 8
    $region85: #{tpu_custom_call.1} parent=1 // pred_fallthru
      _
    // Predicated region
    $region86: #{tpu_custom_call.1} parent=1 // pred_check
      _
    $region87: #{tpu_custom_call.1} parent=1 // pred_check_branch
      %1495 = sbr.rel (0) target = $region89
    $region88: #{tpu_custom_call.1} parent=1 // pred_region
      %1497 = vsyncadd [#allocation16], 0
      %s1498 = sshll.u32 [#allocation17], 4
      %s1499 = int_to_ptr.vmem [resolvable:$true] %s1498
      %s1500 = sshll.u32 %s14, 4
      %s1501 = int_to_ptr.hbm [resolvable:$true] %s1500
      %1506 = dma.vmem_to_hbm [thread:$0]  %s1499, 256, %s1501, [#allocation16], 128, 128, 8
    $region89: #{tpu_custom_call.1} parent=1 // pred_fallthru
      _
    // Predicated region
    $region90: #{tpu_custom_call.1} parent=1 // pred_check
      _
    $region91: #{tpu_custom_call.1} parent=1 // pred_check_branch
      %1508 = sbr.rel (0) target = $region93
    $region92: #{tpu_custom_call.1} parent=1 // pred_region
      %1510 = dma.done [#allocation4], 128
    $region93: #{tpu_custom_call.1} parent=1 // pred_fallthru
      _
    // Predicated region
    $region94: #{tpu_custom_call.1} parent=1 // pred_check
      _
    $region95: #{tpu_custom_call.1} parent=1 // pred_check_branch
      %1512 = sbr.rel (0) target = $region97
    $region96: #{tpu_custom_call.1} parent=1 // pred_region
      %1514 = dma.done [#allocation16], 256
    $region97: #{tpu_custom_call.1} parent=1 // pred_fallthru
      _
    // Predicated region
    $region98: #{tpu_custom_call.1} parent=1 // pred_check
      _
    $region99: #{tpu_custom_call.1} parent=1 // pred_check_branch
      %1516 = sbr.rel (0) target = $region101
    $region100: #{tpu_custom_call.1} parent=1 // pred_region
      %1518 = dma.done [#allocation16], 256
    $region101: #{tpu_custom_call.1} parent=1 // pred_fallthru
      _
    %1519 = vsyncpa [#allocation3], 1
    %1520 = vsyncpa [#allocation6], 1
    %1521 = vsyncpa [#allocation9], 1
    %1522 = vsyncpa [#allocation12], 1
    %1523 = vsyncpa [#allocation4], 1
    %1524 = vsyncpa [#allocation16], 1

</llo_original>
